<compile_context>
chip_gen: v6e
topology: v6e:2x2x1
jax: 0.10.0
libtpu: 0.0.40
codegen_flags: <defaults>
</compile_context>

<pallas_src>
import jax
import jax.numpy as jnp
from jax.experimental import pallas as pl
from jax.experimental.pallas import tpu as pltpu


def _round_up(x, m):
    return ((x + m - 1) // m) * m


def _choose_tm(batch, tm_max=1024):
    """Batch tile: as large as possible (amortize per-step overhead) while
    keeping >= 2 balanced grid steps with minimal padding when batch allows."""
    b8 = _round_up(batch, 8)
    if b8 <= 16:
        return b8
    tm = min(tm_max, _round_up(pl.cdiv(b8, 2), 8))   # at least 2 steps
    steps = pl.cdiv(b8, tm)
    return _round_up(pl.cdiv(b8, steps), 8)          # re-balance -> minimal pad


def _discriminator_kernel(h_ref, w1_ref, b1_ref, w2_ref, b2_ref, w3_ref, b3_ref,
                          o_ref):
    # Cast the f32 activation tile to bf16 in-kernel (no extra HBM pass in the
    # wrapper); MXU accumulates in f32.
    h = h_ref[...].astype(jnp.bfloat16)

    # Layer 1: Linear(512 -> 256) + LeakyReLU(0.2).
    x = jnp.dot(h, w1_ref[...], preferred_element_type=jnp.float32)
    x = x + b1_ref[...]                       # (1, 256) broadcasts over rows
    x = jnp.where(x > 0, x, 0.2 * x)

    # Layer 2: Linear(256 -> 128) + LeakyReLU(0.2).
    x = jnp.dot(x.astype(jnp.bfloat16), w2_ref[...],
                preferred_element_type=jnp.float32)
    x = x + b2_ref[...]                       # (1, 128)
    x = jnp.where(x > 0, x, 0.2 * x)

    # Layer 3: Linear(128 -> 1) + Sigmoid.  An N=1 MXU matmul wastes nearly all
    # result lanes; VPU multiply with the (1,128) weight row + lane reduction.
    logits = jnp.sum(x * w3_ref[...], axis=-1, keepdims=True) + b3_ref[0, 0]
    o_ref[...] = jax.nn.sigmoid(logits).astype(o_ref.dtype)


def _discriminator_forward_impl(h, params, tm=None):
    """h: [B, input_size] float32. params from prepare_params().
    Returns [B, 1] float32 (sigmoid probs)."""
    w1_bf, b1, w2_bf, b2, w3_row, b3 = params
    assert w3_row.shape[0] == 1, "kernel is specialized for num_classes=1"
    B, D = h.shape

    if tm is None:
        tm = _choose_tm(B)
    tm = min(tm, _round_up(B, 8))
    b_pad = _round_up(B, tm)
    if b_pad != B:
        # Only reached when B doesn't split into equal tiles; fuses under jit.
        h = jnp.pad(h, ((0, b_pad - B), (0, 0)))

    grid = (b_pad // tm,)
    # Weights/biases: constant index_map -> resident in VMEM across grid steps.
    resident = lambda shape: pl.BlockSpec(shape, lambda i: (0,) * len(shape))

    out = pl.pallas_call(
        _discriminator_kernel,
        out_shape=jax.ShapeDtypeStruct((b_pad, 1), jnp.float32),
        grid_spec=pl.GridSpec(
            grid=grid,
            in_specs=[
                pl.BlockSpec((tm, D), lambda i: (i, 0)),   # h tile (double-buffered)
                resident(w1_bf.shape), resident(b1.shape),
                resident(w2_bf.shape), resident(b2.shape),
                resident(w3_row.shape),
                pl.BlockSpec(memory_space=pltpu.MemorySpace.SMEM),  # (1,1) bias
            ],
            out_specs=pl.BlockSpec((tm, 1), lambda i: (i, 0)),
        ),
        compiler_params=pltpu.CompilerParams(
            dimension_semantics=("parallel",),   # shard batch tiles across TCs on v7x
        ),
    )(h, w1_bf, b1, w2_bf, b2, w3_row, b3)

    return out[:B]


# Single jit boundary so pad/slice fuse and the pallas_call isn't bracketed by
# un-hidden copy ops; tm is a static (shape-derived) tiling knob.
discriminator_forward = jax.jit(_discriminator_forward_impl, static_argnames=("tm",))


def init_params(key, input_size=512, num_classes=1):
    """Deterministic f32 init mimicking nn.Linear default U[-1/sqrt(fan_in), ...].

    w1, w2 stored as [in, out]; w3 as its PyTorch row [num_classes, 128];
    biases as [1, out] (b3 as [1, 1])."""
    assert num_classes == 1
    params = []
    for (fan_in, fan_out) in [(input_size, 256), (256, 128)]:
        key, kw, kb = jax.random.split(key, 3)
        bound = 1.0 / jnp.sqrt(float(fan_in))
        w = jax.random.uniform(kw, (fan_in, fan_out), jnp.float32, -bound, bound)
        b = jax.random.uniform(kb, (1, fan_out), jnp.float32, -bound, bound)
        params += [w, b]
    key, kw, kb = jax.random.split(key, 3)
    bound = 1.0 / jnp.sqrt(128.0)
    w3_row = jax.random.uniform(kw, (1, 128), jnp.float32, -bound, bound)
    b3 = jax.random.uniform(kb, (1, 1), jnp.float32, -bound, bound)
    params += [w3_row, b3]
    return tuple(params)


def prepare_params(params):
    """One-time bf16 cast of the matmul weights (cache and reuse per step)."""
    w1, b1, w2, b2, w3_row, b3 = params
    return (w1.astype(jnp.bfloat16), b1, w2.astype(jnp.bfloat16), b2, w3_row, b3)


def _reference_forward(h, params):
    """Pure-JAX f32 reference matching the PyTorch module semantics."""
    w1, b1, w2, b2, w3_row, b3 = params
    x = h @ w1 + b1
    x = jnp.where(x > 0, x, 0.2 * x)
    x = x @ w2 + b2
    x = jnp.where(x > 0, x, 0.2 * x)
    x = x @ w3_row.T + b3
    return jax.nn.sigmoid(x)


if __name__ == "__main__":
    key = jax.random.PRNGKey(0)
    k_params, k_h = jax.random.split(key)

    input_size = 512
    num_classes = 1
    batch = 384  # tile heuristic -> two balanced 192-row grid steps, zero padding

    params = init_params(k_params, input_size=input_size, num_classes=num_classes)
    dev_params = prepare_params(params)   # bf16 weights cached once
    h = jax.random.normal(k_h, (batch, input_size), jnp.float32)

    y = discriminator_forward(h, dev_params)
    y = jax.block_until_ready(y)

    y_ref = _reference_forward(h, params)
    assert y.shape == (batch, num_classes)
    # bf16 matmul operands (f32 accumulation) -> loosened tolerance vs f32 ref.
    assert jnp.allclose(y, y_ref, atol=2e-2, rtol=0.0), (
        f"mismatch vs JAX reference, max|diff|={float(jnp.max(jnp.abs(y - y_ref)))}")

    print("KERNEL_OK")
</pallas_src>

<mosaic_0001>
module attributes {stable_mosaic.version = 11 : i64} {
  func.func @_discriminator_kernel(%arg0: i32, %arg1: memref<192x512xf32, #tpu.memory_space<vmem>>, %arg2: memref<512x256xbf16, #tpu.memory_space<vmem>>, %arg3: memref<1x256xf32, #tpu.memory_space<vmem>>, %arg4: memref<256x128xbf16, #tpu.memory_space<vmem>>, %arg5: memref<1x128xf32, #tpu.memory_space<vmem>>, %arg6: memref<1x128xf32, #tpu.memory_space<vmem>>, %arg7: memref<1x1xf32, #tpu.memory_space<smem>>, %arg8: memref<192x1xf32, #tpu.memory_space<vmem>>) attributes {dimension_semantics = [#tpu.dimension_semantics<parallel>], iteration_bounds = array<i64: 2>, scalar_prefetch = 0 : i64, scratch_operands = 0 : i64, tpu.core_type = #tpu.core_type<tc>, window_params = [{transform_indices = @transform_0, window_bounds = array<i64: 192, 512>}, {pipeline_mode = #tpu.pipeline_mode<synchronous>, transform_indices = @transform_1, window_bounds = array<i64: 512, 256>}, {pipeline_mode = #tpu.pipeline_mode<synchronous>, transform_indices = @transform_2, window_bounds = array<i64: 1, 256>}, {pipeline_mode = #tpu.pipeline_mode<synchronous>, transform_indices = @transform_3, window_bounds = array<i64: 256, 128>}, {pipeline_mode = #tpu.pipeline_mode<synchronous>, transform_indices = @transform_4, window_bounds = array<i64: 1, 128>}, {pipeline_mode = #tpu.pipeline_mode<synchronous>, transform_indices = @transform_5, window_bounds = array<i64: 1, 128>}, {transform_indices = @transform_6, window_bounds = array<i64: 1, 1>}, {transform_indices = @transform_7, window_bounds = array<i64: 192, 1>}]} {
    %c0 = arith.constant 0 : index
    %c0_0 = arith.constant 0 : index
    %0 = vector.load %arg1[%c0, %c0_0] : memref<192x512xf32, #tpu.memory_space<vmem>>, vector<192x512xf32>
    %1 = arith.truncf %0 : vector<192x512xf32> to vector<192x512xbf16>
    %c0_1 = arith.constant 0 : index
    %c0_2 = arith.constant 0 : index
    %2 = vector.load %arg2[%c0_1, %c0_2] : memref<512x256xbf16, #tpu.memory_space<vmem>>, vector<512x256xbf16>
    %cst = arith.constant dense<0.000000e+00> : vector<192x256xf32>
    %3 = tpu.matmul %1, %2, %cst {dimension_numbers = #tpu.dot_dimension_numbers<[1], [0], [0], [1], [0, 0, 1, 1], [], []>} : vector<192x512xbf16>, vector<512x256xbf16>, vector<192x256xf32> -> vector<192x256xf32>
    %c0_3 = arith.constant 0 : index
    %c0_4 = arith.constant 0 : index
    %4 = vector.load %arg3[%c0_3, %c0_4] : memref<1x256xf32, #tpu.memory_space<vmem>>, vector<1x256xf32>
    %5 = vector.broadcast %4 : vector<1x256xf32> to vector<192x256xf32>
    %6 = arith.addf %3, %5 : vector<192x256xf32>
    %cst_5 = arith.constant 0.000000e+00 : f32
    %7 = vector.broadcast %cst_5 : f32 to vector<192x256xf32>
    %8 = arith.cmpf ogt, %6, %7 : vector<192x256xf32>
    %cst_6 = arith.constant 2.000000e-01 : f32
    %9 = vector.broadcast %cst_6 : f32 to vector<192x256xf32>
    %10 = arith.mulf %9, %6 : vector<192x256xf32>
    %11 = arith.select %8, %6, %10 : vector<192x256xi1>, vector<192x256xf32>
    %12 = arith.truncf %11 : vector<192x256xf32> to vector<192x256xbf16>
    %c0_7 = arith.constant 0 : index
    %c0_8 = arith.constant 0 : index
    %13 = vector.load %arg4[%c0_7, %c0_8] : memref<256x128xbf16, #tpu.memory_space<vmem>>, vector<256x128xbf16>
    %cst_9 = arith.constant dense<0.000000e+00> : vector<192x128xf32>
    %14 = tpu.matmul %12, %13, %cst_9 {dimension_numbers = #tpu.dot_dimension_numbers<[1], [0], [0], [1], [0, 0, 1, 1], [], []>} : vector<192x256xbf16>, vector<256x128xbf16>, vector<192x128xf32> -> vector<192x128xf32>
    %c0_10 = arith.constant 0 : index
    %c0_11 = arith.constant 0 : index
    %15 = vector.load %arg5[%c0_10, %c0_11] : memref<1x128xf32, #tpu.memory_space<vmem>>, vector<1x128xf32>
    %16 = vector.broadcast %15 : vector<1x128xf32> to vector<192x128xf32>
    %17 = arith.addf %14, %16 : vector<192x128xf32>
    %cst_12 = arith.constant 0.000000e+00 : f32
    %18 = vector.broadcast %cst_12 : f32 to vector<192x128xf32>
    %19 = arith.cmpf ogt, %17, %18 : vector<192x128xf32>
    %cst_13 = arith.constant 2.000000e-01 : f32
    %20 = vector.broadcast %cst_13 : f32 to vector<192x128xf32>
    %21 = arith.mulf %20, %17 : vector<192x128xf32>
    %22 = arith.select %19, %17, %21 : vector<192x128xi1>, vector<192x128xf32>
    %c0_14 = arith.constant 0 : index
    %c0_15 = arith.constant 0 : index
    %23 = vector.load %arg6[%c0_14, %c0_15] : memref<1x128xf32, #tpu.memory_space<vmem>>, vector<1x128xf32>
    %24 = vector.broadcast %23 : vector<1x128xf32> to vector<192x128xf32>
    %25 = arith.mulf %22, %24 : vector<192x128xf32>
    %cst_16 = arith.constant dense<0.000000e+00> : vector<192xf32>
    %26 = vector.multi_reduction <add>, %25, %cst_16 [1] : vector<192x128xf32> to vector<192xf32>
    %27 = vector.shape_cast %26 : vector<192xf32> to vector<192x1xf32>
    %c0_17 = arith.constant 0 : index
    %c0_18 = arith.constant 0 : index
    %28 = memref.load %arg7[%c0_17, %c0_18] : memref<1x1xf32, #tpu.memory_space<smem>>
    %29 = vector.broadcast %28 : f32 to vector<192x1xf32>
    %30 = arith.addf %27, %29 : vector<192x1xf32>
    %31 = arith.negf %30 : vector<192x1xf32>
    %32 = math.exp %31 : vector<192x1xf32>
    %cst_19 = arith.constant 1.000000e+00 : f32
    %33 = vector.broadcast %cst_19 : f32 to vector<192x1xf32>
    %34 = arith.addf %33, %32 : vector<192x1xf32>
    %35 = arith.divf %33, %34 : vector<192x1xf32>
    %c0_20 = arith.constant 0 : index
    %c0_21 = arith.constant 0 : index
    %36 = vector.load %arg8[%c0_20, %c0_21] : memref<192x1xf32, #tpu.memory_space<vmem>>, vector<192x1xf32>
    tpu.vector_store %arg8[%c0_20, %c0_21], %35 {strides = array<i32>} : memref<192x1xf32, #tpu.memory_space<vmem>>, vector<192x1xf32>,
    return
  }
  func.func @transform_0(%arg0: i32) -> (i32, i32) {
    %c0_i32 = arith.constant 0 : i32
    %c0_i32_0 = arith.constant 0 : i32
    return %arg0, %c0_i32 : i32, i32
  }
  func.func @transform_1(%arg0: i32) -> (i32, i32) {
    %c0_i32 = arith.constant 0 : i32
    %c0_i32_0 = arith.constant 0 : i32
    %c0_i32_1 = arith.constant 0 : i32
    return %c0_i32, %c0_i32_0 : i32, i32
  }
  func.func @transform_2(%arg0: i32) -> (i32, i32) {
    %c0_i32 = arith.constant 0 : i32
    %c0_i32_0 = arith.constant 0 : i32
    %c0_i32_1 = arith.constant 0 : i32
    return %c0_i32, %c0_i32_0 : i32, i32
  }
  func.func @transform_3(%arg0: i32) -> (i32, i32) {
    %c0_i32 = arith.constant 0 : i32
    %c0_i32_0 = arith.constant 0 : i32
    %c0_i32_1 = arith.constant 0 : i32
    return %c0_i32, %c0_i32_0 : i32, i32
  }
  func.func @transform_4(%arg0: i32) -> (i32, i32) {
    %c0_i32 = arith.constant 0 : i32
    %c0_i32_0 = arith.constant 0 : i32
    %c0_i32_1 = arith.constant 0 : i32
    return %c0_i32, %c0_i32_0 : i32, i32
  }
  func.func @transform_5(%arg0: i32) -> (i32, i32) {
    %c0_i32 = arith.constant 0 : i32
    %c0_i32_0 = arith.constant 0 : i32
    %c0_i32_1 = arith.constant 0 : i32
    return %c0_i32, %c0_i32_0 : i32, i32
  }
  func.func @transform_6(%arg0: i32) -> (i32, i32) {
    %c0_i32 = arith.constant 0 : i32
    %c0_i32_0 = arith.constant 0 : i32
    %c0_i32_1 = arith.constant 0 : i32
    return %c0_i32, %c0_i32_0 : i32, i32
  }
  func.func @transform_7(%arg0: i32) -> (i32, i32) {
    %c0_i32 = arith.constant 0 : i32
    %c0_i32_0 = arith.constant 0 : i32
    return %arg0, %c0_i32 : i32, i32
  }
}

</mosaic_0001>

<llo_original>
// kernel: _discriminator_forward_impl.1
$region0: #{_discriminator_forward_impl.1}
  #allocation0 [shape = 'u32[]', space=smem, size = 0x4, offset = 0x4, fixed_abs, tag = 'smem constant byte address 0x4 - core index']
  #allocation1 [shape = 'u32[144,128]{1,0:T(1,128)}', space=vmem, size = 0x12000, scoped, tag = 'internal scratch']
  #allocation2 [shape = 'f32[1,1]{1,0:T(1,128)S(6)}', space=smem, size = 0x200, scoped, tag = 'scoped memory for _discriminator_forward_impl.1']
  %s0 = inlined_call_operand.hbm [shape: f32[384,512], index: 0, kind: input, shape index: {}]
  %s1 = inlined_call_operand.hbm [shape: bf16[512,256], index: 1, kind: input, shape index: {}]
  %s2 = inlined_call_operand.vmem [shape: f32[1,256], index: 2, kind: input, shape index: {}]
  %s3 = inlined_call_operand.hbm [shape: bf16[256,128], index: 3, kind: input, shape index: {}]
  %s4 = inlined_call_operand.vmem [shape: f32[1,128], index: 4, kind: input, shape index: {}]
  %s5 = inlined_call_operand.vmem [shape: f32[1,128], index: 5, kind: input, shape index: {}]
  %s6 = inlined_call_operand.<no memory space> [shape: f32[1,1], index: 6, kind: input, shape index: {}]
  %s7 = inlined_call_operand.vmem [shape: f32[384,1], index: 7, kind: output, shape index: {}]
  %s8 = sld [smem:[#allocation0]]
  $region73: #{_discriminator_forward_impl.1} parent=0
    _
  %s10 = ssub.s32 1, %s8
  %s11 = scalar_select 0, %s10, %s8
  %12 = sst [smem:[#allocation2]] %s6
  $region1: #{_discriminator_forward_impl.1} parent=0
    #allocation3 [shape = 'u8[786432]{0}', space=vmem, size = 0xc0000, scoped, tag = 'input window, operand 0']
    #allocation4 [shape = 's32[2]{0}', space=sflag, size = 0x8, scoped, tag = 'scoped memory for _discriminator_forward_impl.1']
    #allocation5 [shape = 'u8[262144]{0}', space=vmem, size = 0x40000, scoped, tag = 'input window, operand 1, single buffered']
    #allocation6 [shape = 's32[1]{0}', space=sflag, size = 0x4, scoped, tag = 'scoped memory for _discriminator_forward_impl.1']
    #allocation7 [shape = 'u8[65536]{0}', space=vmem, size = 0x10000, scoped, tag = 'input window, operand 3, single buffered']
    %13 = vsyncpa [#allocation4], 0
    %s14 = scalar_lea.sflag [#allocation4], 1
    %15 = vsyncpa %s14, 0
    %16 = vsyncpa [#allocation6], 0
    loop: start=0, step=1, limit=4
    $region2: #{_discriminator_forward_impl.1} parent=1 // loop_pre_header
      _
    $region3: #{_discriminator_forward_impl.1} parent=1 // loop_header
      %s18 = sphi 0, %s22
      %p19 = scmp.ge.s32.totalorder %s18, 4
      %s28 = sphi 0, %s30
      %s31 = sphi 0, %s28
      %s32 = sphi 0, %s31
      %s48 = sphi 0, %s32
      %s52 = sphi 0, %s52
      %s54 = sphi 0, %s52
      %s55 = sphi 0, %s54
      %s69 = sphi 0, %s55
      %s73 = sphi 0, %s73
      %s75 = sphi 0, %s73
      %s76 = sphi 0, %s75
      %s90 = sphi 0, %s76
      %s94 = sphi 0, %s94
      %s96 = sphi 0, %s94
      %s97 = sphi 0, %s96
      %s111 = sphi 0, %s97
      %s115 = sphi 0, %s115
      %s117 = sphi 0, %s115
      %s118 = sphi 0, %s117
      %s132 = sphi 0, %s118
      %s136 = sphi 0, %s136
      %s138 = sphi 0, %s136
      %s139 = sphi 0, %s138
      %s153 = sphi 0, %s139
      %s157 = sphi 0, %s157
      %s159 = sphi 0, %s157
      %s160 = sphi 0, %s159
      %s174 = sphi 0, %s160
      %s180 = sphi 0, %s182
      %s183 = sphi 0, %s180
      %s184 = sphi 0, %s183
      %s200 = sphi 0, %s184
    $region4: #{_discriminator_forward_impl.1} parent=1 // loop_header_branch
      %21 = sbr.rel (%p19) target = $region8
    $region5: #{_discriminator_forward_impl.1} parent=1 // loop_body
      %s23 = ssub.s32 %s18, 1
      %s24 = ssub.s32 %s18, 2
      %s25 = sadd.s32 %s18, 1
      %s26 = ssub.s32 %s18, %s25
      %p27 = scmp.eq.s32.totalorder %s26, 0
      %s29 = sadd.s32 %s28, 1
      %s30 = scalar_select %p27, %s28, %s29
      %p33 = pneg %p27
      %p34 = scmp.eq.s32.totalorder %s18, 1
      %p35 = por %p33, %p34
      %p36 = scmp.ne.s32.totalorder %s28, %s31
      %p37 = scmp.eq.s32.totalorder %s18, 0
      %p38 = por %p36, %p37
      %p39 = scmp.ne.s32.totalorder %s28, %s31
      %p40 = scmp.eq.s32.totalorder %s23, 1
      %p41 = por %p39, %p40
      %p42 = scmp.ne.s32.totalorder %s31, %s32
      %p43 = scmp.eq.s32.totalorder %s23, 0
      %p44 = por %p42, %p43
      %p45 = scmp.ne.s32.totalorder %s31, %s32
      %p46 = scmp.eq.s32.totalorder %s24, 1
      %p47 = por %p45, %p46
      %p49 = scmp.ne.s32.totalorder %s32, %s48
      %p50 = scmp.eq.s32.totalorder %s24, 0
      %p51 = por %p49, %p50
      %s53 = sadd.s32 %s52, 1
      %p56 = scmp.eq.s32.totalorder %s18, 1
      %p57 = scmp.ne.s32.totalorder %s52, %s54
      %p58 = scmp.eq.s32.totalorder %s18, 0
      %p59 = por %p57, %p58
      %p60 = scmp.ne.s32.totalorder %s52, %s54
      %p61 = scmp.eq.s32.totalorder %s23, 1
      %p62 = por %p60, %p61
      %p63 = scmp.ne.s32.totalorder %s54, %s55
      %p64 = scmp.eq.s32.totalorder %s23, 0
      %p65 = por %p63, %p64
      %p66 = scmp.ne.s32.totalorder %s54, %s55
      %p67 = scmp.eq.s32.totalorder %s24, 1
      %p68 = por %p66, %p67
      %p70 = scmp.ne.s32.totalorder %s55, %s69
      %p71 = scmp.eq.s32.totalorder %s24, 0
      %p72 = por %p70, %p71
      %s74 = sadd.s32 %s73, 1
      %p77 = scmp.eq.s32.totalorder %s18, 1
      %p78 = scmp.ne.s32.totalorder %s73, %s75
      %p79 = scmp.eq.s32.totalorder %s18, 0
      %p80 = por %p78, %p79
      %p81 = scmp.ne.s32.totalorder %s73, %s75
      %p82 = scmp.eq.s32.totalorder %s23, 1
      %p83 = por %p81, %p82
      %p84 = scmp.ne.s32.totalorder %s75, %s76
      %p85 = scmp.eq.s32.totalorder %s23, 0
      %p86 = por %p84, %p85
      %p87 = scmp.ne.s32.totalorder %s75, %s76
      %p88 = scmp.eq.s32.totalorder %s24, 1
      %p89 = por %p87, %p88
      %p91 = scmp.ne.s32.totalorder %s76, %s90
      %p92 = scmp.eq.s32.totalorder %s24, 0
      %p93 = por %p91, %p92
      %s95 = sadd.s32 %s94, 1
      %p98 = scmp.eq.s32.totalorder %s18, 1
      %p99 = scmp.ne.s32.totalorder %s94, %s96
      %p100 = scmp.eq.s32.totalorder %s18, 0
      %p101 = por %p99, %p100
      %p102 = scmp.ne.s32.totalorder %s94, %s96
      %p103 = scmp.eq.s32.totalorder %s23, 1
      %p104 = por %p102, %p103
      %p105 = scmp.ne.s32.totalorder %s96, %s97
      %p106 = scmp.eq.s32.totalorder %s23, 0
      %p107 = por %p105, %p106
      %p108 = scmp.ne.s32.totalorder %s96, %s97
      %p109 = scmp.eq.s32.totalorder %s24, 1
      %p110 = por %p108, %p109
      %p112 = scmp.ne.s32.totalorder %s97, %s111
      %p113 = scmp.eq.s32.totalorder %s24, 0
      %p114 = por %p112, %p113
      %s116 = sadd.s32 %s115, 1
      %p119 = scmp.eq.s32.totalorder %s18, 1
      %p120 = scmp.ne.s32.totalorder %s115, %s117
      %p121 = scmp.eq.s32.totalorder %s18, 0
      %p122 = por %p120, %p121
      %p123 = scmp.ne.s32.totalorder %s115, %s117
      %p124 = scmp.eq.s32.totalorder %s23, 1
      %p125 = por %p123, %p124
      %p126 = scmp.ne.s32.totalorder %s117, %s118
      %p127 = scmp.eq.s32.totalorder %s23, 0
      %p128 = por %p126, %p127
      %p129 = scmp.ne.s32.totalorder %s117, %s118
      %p130 = scmp.eq.s32.totalorder %s24, 1
      %p131 = por %p129, %p130
      %p133 = scmp.ne.s32.totalorder %s118, %s132
      %p134 = scmp.eq.s32.totalorder %s24, 0
      %p135 = por %p133, %p134
      %s137 = sadd.s32 %s136, 1
      %p140 = scmp.eq.s32.totalorder %s18, 1
      %p141 = scmp.ne.s32.totalorder %s136, %s138
      %p142 = scmp.eq.s32.totalorder %s18, 0
      %p143 = por %p141, %p142
      %p144 = scmp.ne.s32.totalorder %s136, %s138
      %p145 = scmp.eq.s32.totalorder %s23, 1
      %p146 = por %p144, %p145
      %p147 = scmp.ne.s32.totalorder %s138, %s139
      %p148 = scmp.eq.s32.totalorder %s23, 0
      %p149 = por %p147, %p148
      %p150 = scmp.ne.s32.totalorder %s138, %s139
      %p151 = scmp.eq.s32.totalorder %s24, 1
      %p152 = por %p150, %p151
      %p154 = scmp.ne.s32.totalorder %s139, %s153
      %p155 = scmp.eq.s32.totalorder %s24, 0
      %p156 = por %p154, %p155
      %s158 = sadd.s32 %s157, 1
      %p161 = scmp.eq.s32.totalorder %s18, 1
      %p162 = scmp.ne.s32.totalorder %s157, %s159
      %p163 = scmp.eq.s32.totalorder %s18, 0
      %p164 = por %p162, %p163
      %p165 = scmp.ne.s32.totalorder %s157, %s159
      %p166 = scmp.eq.s32.totalorder %s23, 1
      %p167 = por %p165, %p166
      %p168 = scmp.ne.s32.totalorder %s159, %s160
      %p169 = scmp.eq.s32.totalorder %s23, 0
      %p170 = por %p168, %p169
      %p171 = scmp.ne.s32.totalorder %s159, %s160
      %p172 = scmp.eq.s32.totalorder %s24, 1
      %p173 = por %p171, %p172
      %p175 = scmp.ne.s32.totalorder %s160, %s174
      %p176 = scmp.eq.s32.totalorder %s24, 0
      %p177 = por %p175, %p176
      %s178 = ssub.s32 %s18, %s25
      %p179 = scmp.eq.s32.totalorder %s178, 0
      %s181 = sadd.s32 %s180, 1
      %s182 = scalar_select %p179, %s180, %s181
      %p185 = pneg %p179
      %p186 = scmp.eq.s32.totalorder %s18, 1
      %p187 = por %p185, %p186
      %p188 = scmp.ne.s32.totalorder %s180, %s183
      %p189 = scmp.eq.s32.totalorder %s18, 0
      %p190 = por %p188, %p189
      %p191 = scmp.ne.s32.totalorder %s180, %s183
      %p192 = scmp.eq.s32.totalorder %s23, 1
      %p193 = por %p191, %p192
      %p194 = scmp.ne.s32.totalorder %s183, %s184
      %p195 = scmp.eq.s32.totalorder %s23, 0
      %p196 = por %p194, %p195
      %p197 = scmp.ne.s32.totalorder %s183, %s184
      %p198 = scmp.eq.s32.totalorder %s24, 1
      %p199 = por %p197, %p198
      %p201 = scmp.ne.s32.totalorder %s184, %s200
      %p202 = scmp.eq.s32.totalorder %s24, 0
      %p203 = por %p201, %p202
      %p204 = scmp.le.s32.totalorder 1, %s18
      %p205 = scmp.lt.s32.totalorder %s18, 3
      %p206 = pnand %p204, %p205
      %p207 = pneg %p206
      // Predicated region
      $region9: #{_discriminator_forward_impl.1} parent=5 // pred_check
        _
      $region10: #{_discriminator_forward_impl.1} parent=5 // pred_check_branch
        %209 = sbr.rel (%p206) target = $region12
      $region11: #{_discriminator_forward_impl.1} parent=5 // pred_region
        %s210 = ssub.s32 %s18, 1
        // Predicated region
        $region13: #{_discriminator_forward_impl.1} parent=11 // pred_check
          %p211 = pneg %p65
        $region14: #{_discriminator_forward_impl.1} parent=11 // pred_check_branch
          %213 = sbr.rel (%p211) target = $region16
        $region15: #{_discriminator_forward_impl.1} parent=11 // pred_region
          %s215 = ssub.s32 8192, 8192
          %216 = vsyncadd [#allocation6], %s215
          %s217 = sshll.u32 [#allocation5], 4
          %s218 = int_to_ptr.vmem [resolvable:$true] %s217
          %223 = dma.hbm_to_vmem [thread:$0]  %s1, 8192, %s218, [#allocation6], 128, 128, 8
        $region16: #{_discriminator_forward_impl.1} parent=11 // pred_fallthru
          _
        // Predicated region
        $region17: #{_discriminator_forward_impl.1} parent=11 // pred_check
          %p224 = pneg %p86
        $region18: #{_discriminator_forward_impl.1} parent=11 // pred_check_branch
          %226 = sbr.rel (%p224) target = $region20
        $region19: #{_discriminator_forward_impl.1} parent=11 // pred_region
          _
        $region20: #{_discriminator_forward_impl.1} parent=11 // pred_fallthru
          _
        // Predicated region
        $region21: #{_discriminator_forward_impl.1} parent=11 // pred_check
          %p227 = pneg %p107
        $region22: #{_discriminator_forward_impl.1} parent=11 // pred_check_branch
          %229 = sbr.rel (%p227) target = $region24
        $region23: #{_discriminator_forward_impl.1} parent=11 // pred_region
          %s231 = ssub.s32 2048, 2048
          %232 = vsyncadd [#allocation6], %s231
          %s233 = sshll.u32 [#allocation7], 4
          %s234 = int_to_ptr.vmem [resolvable:$true] %s233
          %239 = dma.hbm_to_vmem [thread:$0]  %s3, 2048, %s234, [#allocation6], 64, 64, 4
        $region24: #{_discriminator_forward_impl.1} parent=11 // pred_fallthru
          _
        // Predicated region
        $region25: #{_discriminator_forward_impl.1} parent=11 // pred_check
          %p240 = pneg %p128
        $region26: #{_discriminator_forward_impl.1} parent=11 // pred_check_branch
          %242 = sbr.rel (%p240) target = $region28
        $region27: #{_discriminator_forward_impl.1} parent=11 // pred_region
          _
        $region28: #{_discriminator_forward_impl.1} parent=11 // pred_fallthru
          _
        // Predicated region
        $region29: #{_discriminator_forward_impl.1} parent=11 // pred_check
          %p243 = pneg %p149
        $region30: #{_discriminator_forward_impl.1} parent=11 // pred_check_branch
          %245 = sbr.rel (%p243) target = $region32
        $region31: #{_discriminator_forward_impl.1} parent=11 // pred_region
          _
        $region32: #{_discriminator_forward_impl.1} parent=11 // pred_fallthru
          _
        // Predicated region
        $region33: #{_discriminator_forward_impl.1} parent=11 // pred_check
          %p246 = pneg %p170
        $region34: #{_discriminator_forward_impl.1} parent=11 // pred_check_branch
          %248 = sbr.rel (%p246) target = $region36
        $region35: #{_discriminator_forward_impl.1} parent=11 // pred_region
          _
        $region36: #{_discriminator_forward_impl.1} parent=11 // pred_fallthru
          _
      $region12: #{_discriminator_forward_impl.1} parent=5 // pred_fallthru
        _
      %p249 = scmp.lt.s32.totalorder %s18, 2
      // Predicated region
      $region37: #{_discriminator_forward_impl.1} parent=5 // pred_check
        %p250 = pneg %p249
      $region38: #{_discriminator_forward_impl.1} parent=5 // pred_check_branch
        %252 = sbr.rel (%p250) target = $region40
      $region39: #{_discriminator_forward_impl.1} parent=5 // pred_region
        // Predicated region
        $region41: #{_discriminator_forward_impl.1} parent=39 // pred_check
          %p253 = pneg %p38
        $region42: #{_discriminator_forward_impl.1} parent=39 // pred_check_branch
          %255 = sbr.rel (%p253) target = $region44
        $region43: #{_discriminator_forward_impl.1} parent=39 // pred_region
          %s256 = sand.u32 %s28, 1
          %s257 = scalar_lea.sflag [#allocation4], %s256
          %s258 = sand.u32 %s28, 1
          %s259 = smul.addr %s258, 768
          %s260 = scalar_lea.vmem [#allocation3], %s259
          %s261 = smul.u32 24, %s18
          %s263 = ssub.s32 12288, 12288
          %264 = vsyncadd %s257, %s263
          %s265 = smul.addr %s261, 4
          %s266 = smul.addr %s265, 128
          %s267 = scalar_lea.hbm %s0, %s266
          %s268 = sshll.u32 %s260, 4
          %s269 = int_to_ptr.vmem [resolvable:$true] %s268
          %274 = dma.hbm_to_vmem [thread:$0]  %s267, 12288, %s269, %s257, 512, 512, 32
        $region44: #{_discriminator_forward_impl.1} parent=39 // pred_fallthru
          _
      $region40: #{_discriminator_forward_impl.1} parent=5 // pred_fallthru
        _
      %p275 = scmp.le.s32.totalorder 1, %s18
      %p276 = scmp.lt.s32.totalorder %s18, 3
      %p277 = pnand %p275, %p276
      %p278 = pneg %p277
      // Predicated region
      $region45: #{_discriminator_forward_impl.1} parent=5 // pred_check
        _
      $region46: #{_discriminator_forward_impl.1} parent=5 // pred_check_branch
        %280 = sbr.rel (%p277) target = $region48
      $region47: #{_discriminator_forward_impl.1} parent=5 // pred_region
        %s281 = ssub.s32 %s18, 1
        %s282 = sand.u32 %s31, 1
        %s283 = scalar_lea.sflag [#allocation4], %s282
        %s284 = sand.u32 %s31, 1
        %s285 = smul.addr %s284, 768
        %s286 = scalar_lea.vmem [#allocation3], %s285
        // Predicated region
        $region49: #{_discriminator_forward_impl.1} parent=47 // pred_check
          %p287 = pneg %p44
        $region50: #{_discriminator_forward_impl.1} parent=47 // pred_check_branch
          %289 = sbr.rel (%p287) target = $region52
        $region51: #{_discriminator_forward_impl.1} parent=47 // pred_region
          %290 = dma.done %s283, 12288
        $region52: #{_discriminator_forward_impl.1} parent=47 // pred_fallthru
          _
        // Predicated region
        $region53: #{_discriminator_forward_impl.1} parent=47 // pred_check
          %p291 = pneg %p65
        $region54: #{_discriminator_forward_impl.1} parent=47 // pred_check_branch
          %293 = sbr.rel (%p291) target = $region56
        $region55: #{_discriminator_forward_impl.1} parent=47 // pred_region
          %294 = dma.done [#allocation6], 8192
        $region56: #{_discriminator_forward_impl.1} parent=47 // pred_fallthru
          _
        // Predicated region
        $region57: #{_discriminator_forward_impl.1} parent=47 // pred_check
          %p295 = pneg %p107
        $region58: #{_discriminator_forward_impl.1} parent=47 // pred_check_branch
          %297 = sbr.rel (%p295) target = $region60
        $region59: #{_discriminator_forward_impl.1} parent=47 // pred_region
          %298 = dma.done [#allocation6], 2048
        $region60: #{_discriminator_forward_impl.1} parent=47 // pred_fallthru
          _
        %s299 = sand.u32 %s31, 1
        %s300 = scalar_lea.sflag [#allocation4], %s299
        %s301 = sand.u32 %s31, 1
        %s302 = smul.addr %s301, 768
        %s303 = scalar_lea.vmem [#allocation3], %s302
        %p304 = pneg %p44
        %p305 = pneg %p41
        %p306 = pneg %p65
        %p307 = pneg %p62
        %p308 = pneg %p86
        %p309 = pneg %p83
        %p310 = pneg %p107
        %p311 = pneg %p104
        %p312 = pneg %p128
        %p313 = pneg %p125
        %p314 = pneg %p149
        %p315 = pneg %p146
        %p316 = pneg %p170
        %p317 = pneg %p167
        %p318 = pneg %p196
        %p319 = pneg %p193
        %s320 = smul.u32 24, %s23
        %p321 = scmp.lt.s32.totalorder %s320, 47
        %s322 = scalar_select %p321, %s320, 47
        %s323 = smul.addr %s322, 8
        %s324 = scalar_lea.vmem %s7, %s323
        %s325 = smul.u32 24, %s23
        %s326 = smul.u32 24, %s23
        %p327 = scmp.lt.s32.totalorder %s326, 47
        %s328 = scalar_select %p327, %s326, 47
        %s329 = smul.addr %s328, 8
        %s330 = scalar_lea.vmem %s7, %s329
        %s331 = smul.u32 24, %s23
        %v333 = vld [vmem:[%s286] sm:$0xff]
        %v334 = vld [vmem:[%s286 + $0x8] sm:$0xff]
        %v335 = vld [vmem:[%s286 + $0x10] sm:$0xff]
        %v336 = vld [vmem:[%s286 + $0x18] sm:$0xff]
        %v337 = vld [vmem:[%s286 + $0x20] sm:$0xff]
        %v338 = vld [vmem:[%s286 + $0x28] sm:$0xff]
        %v339 = vld [vmem:[%s286 + $0x30] sm:$0xff]
        %v340 = vld [vmem:[%s286 + $0x38] sm:$0xff]
        %v341 = vld [vmem:[%s286 + $0x40] sm:$0xff]
        %v342 = vld [vmem:[%s286 + $0x48] sm:$0xff]
        %v343 = vld [vmem:[%s286 + $0x50] sm:$0xff]
        %v344 = vld [vmem:[%s286 + $0x58] sm:$0xff]
        %v345 = vld [vmem:[%s286 + $0x60] sm:$0xff]
        %v346 = vld [vmem:[%s286 + $0x68] sm:$0xff]
        %v347 = vld [vmem:[%s286 + $0x70] sm:$0xff]
        %v348 = vld [vmem:[%s286 + $0x78] sm:$0xff]
        %v349 = vld [vmem:[%s286 + $0x80] sm:$0xff]
        %v350 = vld [vmem:[%s286 + $0x88] sm:$0xff]
        %v351 = vld [vmem:[%s286 + $0x90] sm:$0xff]
        %v352 = vld [vmem:[%s286 + $0x98] sm:$0xff]
        %v353 = vld [vmem:[%s286 + $0xa0] sm:$0xff]
        %v354 = vld [vmem:[%s286 + $0xa8] sm:$0xff]
        %v355 = vld [vmem:[%s286 + $0xb0] sm:$0xff]
        %v356 = vld [vmem:[%s286 + $0xb8] sm:$0xff]
        %v357 = vld [vmem:[%s286 + $0xc0] sm:$0xff]
        %v358 = vld [vmem:[%s286 + $0xc8] sm:$0xff]
        %v359 = vld [vmem:[%s286 + $0xd0] sm:$0xff]
        %v360 = vld [vmem:[%s286 + $0xd8] sm:$0xff]
        %v361 = vld [vmem:[%s286 + $0xe0] sm:$0xff]
        %v362 = vld [vmem:[%s286 + $0xe8] sm:$0xff]
        %v363 = vld [vmem:[%s286 + $0xf0] sm:$0xff]
        %v364 = vld [vmem:[%s286 + $0xf8] sm:$0xff]
        %v365 = vld [vmem:[%s286 + $0x100] sm:$0xff]
        %v366 = vld [vmem:[%s286 + $0x108] sm:$0xff]
        %v367 = vld [vmem:[%s286 + $0x110] sm:$0xff]
        %v368 = vld [vmem:[%s286 + $0x118] sm:$0xff]
        %v369 = vld [vmem:[%s286 + $0x120] sm:$0xff]
        %v370 = vld [vmem:[%s286 + $0x128] sm:$0xff]
        %v371 = vld [vmem:[%s286 + $0x130] sm:$0xff]
        %v372 = vld [vmem:[%s286 + $0x138] sm:$0xff]
        %v373 = vld [vmem:[%s286 + $0x140] sm:$0xff]
        %v374 = vld [vmem:[%s286 + $0x148] sm:$0xff]
        %v375 = vld [vmem:[%s286 + $0x150] sm:$0xff]
        %v376 = vld [vmem:[%s286 + $0x158] sm:$0xff]
        %v377 = vld [vmem:[%s286 + $0x160] sm:$0xff]
        %v378 = vld [vmem:[%s286 + $0x168] sm:$0xff]
        %v379 = vld [vmem:[%s286 + $0x170] sm:$0xff]
        %v380 = vld [vmem:[%s286 + $0x178] sm:$0xff]
        %v381 = vld [vmem:[%s286 + $0x180] sm:$0xff]
        %v382 = vld [vmem:[%s286 + $0x188] sm:$0xff]
        %v383 = vld [vmem:[%s286 + $0x190] sm:$0xff]
        %v384 = vld [vmem:[%s286 + $0x198] sm:$0xff]
        %v385 = vld [vmem:[%s286 + $0x1a0] sm:$0xff]
        %v386 = vld [vmem:[%s286 + $0x1a8] sm:$0xff]
        %v387 = vld [vmem:[%s286 + $0x1b0] sm:$0xff]
        %v388 = vld [vmem:[%s286 + $0x1b8] sm:$0xff]
        %v389 = vld [vmem:[%s286 + $0x1c0] sm:$0xff]
        %v390 = vld [vmem:[%s286 + $0x1c8] sm:$0xff]
        %v391 = vld [vmem:[%s286 + $0x1d0] sm:$0xff]
        %v392 = vld [vmem:[%s286 + $0x1d8] sm:$0xff]
        %v393 = vld [vmem:[%s286 + $0x1e0] sm:$0xff]
        %v394 = vld [vmem:[%s286 + $0x1e8] sm:$0xff]
        %v395 = vld [vmem:[%s286 + $0x1f0] sm:$0xff]
        %v396 = vld [vmem:[%s286 + $0x1f8] sm:$0xff]
        %v397 = vld [vmem:[%s286 + $0x200] sm:$0xff]
        %v398 = vld [vmem:[%s286 + $0x208] sm:$0xff]
        %v399 = vld [vmem:[%s286 + $0x210] sm:$0xff]
        %v400 = vld [vmem:[%s286 + $0x218] sm:$0xff]
        %v401 = vld [vmem:[%s286 + $0x220] sm:$0xff]
        %v402 = vld [vmem:[%s286 + $0x228] sm:$0xff]
        %v403 = vld [vmem:[%s286 + $0x230] sm:$0xff]
        %v404 = vld [vmem:[%s286 + $0x238] sm:$0xff]
        %v405 = vld [vmem:[%s286 + $0x240] sm:$0xff]
        %v406 = vld [vmem:[%s286 + $0x248] sm:$0xff]
        %v407 = vld [vmem:[%s286 + $0x250] sm:$0xff]
        %v408 = vld [vmem:[%s286 + $0x258] sm:$0xff]
        %v409 = vld [vmem:[%s286 + $0x260] sm:$0xff]
        %v410 = vld [vmem:[%s286 + $0x268] sm:$0xff]
        %v411 = vld [vmem:[%s286 + $0x270] sm:$0xff]
        %v412 = vld [vmem:[%s286 + $0x278] sm:$0xff]
        %v413 = vld [vmem:[%s286 + $0x280] sm:$0xff]
        %v414 = vld [vmem:[%s286 + $0x288] sm:$0xff]
        %v415 = vld [vmem:[%s286 + $0x290] sm:$0xff]
        %v416 = vld [vmem:[%s286 + $0x298] sm:$0xff]
        %v417 = vld [vmem:[%s286 + $0x2a0] sm:$0xff]
        %v418 = vld [vmem:[%s286 + $0x2a8] sm:$0xff]
        %v419 = vld [vmem:[%s286 + $0x2b0] sm:$0xff]
        %v420 = vld [vmem:[%s286 + $0x2b8] sm:$0xff]
        %v421 = vld [vmem:[%s286 + $0x2c0] sm:$0xff]
        %v422 = vld [vmem:[%s286 + $0x2c8] sm:$0xff]
        %v423 = vld [vmem:[%s286 + $0x2d0] sm:$0xff]
        %v424 = vld [vmem:[%s286 + $0x2d8] sm:$0xff]
        %v425 = vld [vmem:[%s286 + $0x2e0] sm:$0xff]
        %v426 = vld [vmem:[%s286 + $0x2e8] sm:$0xff]
        %v427 = vld [vmem:[%s286 + $0x2f0] sm:$0xff]
        %v428 = vld [vmem:[%s286 + $0x2f8] sm:$0xff]
        %v429 = vpack.c.bf16 %v337, %v333
        %v430 = vpack.c.bf16 %v338, %v334
        %v431 = vpack.c.bf16 %v339, %v335
        %v432 = vpack.c.bf16 %v340, %v336
        %v433 = vpack.c.bf16 %v345, %v341
        %v434 = vpack.c.bf16 %v346, %v342
        %v435 = vpack.c.bf16 %v347, %v343
        %v436 = vpack.c.bf16 %v348, %v344
        %v437 = vpack.c.bf16 %v353, %v349
        %v438 = vpack.c.bf16 %v354, %v350
        %v439 = vpack.c.bf16 %v355, %v351
        %v440 = vpack.c.bf16 %v356, %v352
        %v441 = vpack.c.bf16 %v361, %v357
        %v442 = vpack.c.bf16 %v362, %v358
        %v443 = vpack.c.bf16 %v363, %v359
        %v444 = vpack.c.bf16 %v364, %v360
        %v445 = vpack.c.bf16 %v369, %v365
        %v446 = vpack.c.bf16 %v370, %v366
        %v447 = vpack.c.bf16 %v371, %v367
        %v448 = vpack.c.bf16 %v372, %v368
        %v449 = vpack.c.bf16 %v377, %v373
        %v450 = vpack.c.bf16 %v378, %v374
        %v451 = vpack.c.bf16 %v379, %v375
        %v452 = vpack.c.bf16 %v380, %v376
        %v453 = vpack.c.bf16 %v385, %v381
        %v454 = vpack.c.bf16 %v386, %v382
        %v455 = vpack.c.bf16 %v387, %v383
        %v456 = vpack.c.bf16 %v388, %v384
        %v457 = vpack.c.bf16 %v393, %v389
        %v458 = vpack.c.bf16 %v394, %v390
        %v459 = vpack.c.bf16 %v395, %v391
        %v460 = vpack.c.bf16 %v396, %v392
        %v461 = vpack.c.bf16 %v401, %v397
        %v462 = vpack.c.bf16 %v402, %v398
        %v463 = vpack.c.bf16 %v403, %v399
        %v464 = vpack.c.bf16 %v404, %v400
        %v465 = vpack.c.bf16 %v409, %v405
        %v466 = vpack.c.bf16 %v410, %v406
        %v467 = vpack.c.bf16 %v411, %v407
        %v468 = vpack.c.bf16 %v412, %v408
        %v469 = vpack.c.bf16 %v417, %v413
        %v470 = vpack.c.bf16 %v418, %v414
        %v471 = vpack.c.bf16 %v419, %v415
        %v472 = vpack.c.bf16 %v420, %v416
        %v473 = vpack.c.bf16 %v425, %v421
        %v474 = vpack.c.bf16 %v426, %v422
        %v475 = vpack.c.bf16 %v427, %v423
        %v476 = vpack.c.bf16 %v428, %v424
        %v477 = vld [vmem:[#allocation5] sm:$0xff]
        %v478 = vld [vmem:[#allocation5 + $0x8] sm:$0xff]
        %v479 = vld [vmem:[#allocation5 + $0x10] sm:$0xff]
        %v480 = vld [vmem:[#allocation5 + $0x18] sm:$0xff]
        %v481 = vld [vmem:[#allocation5 + $0x20] sm:$0xff]
        %v482 = vld [vmem:[#allocation5 + $0x28] sm:$0xff]
        %v483 = vld [vmem:[#allocation5 + $0x30] sm:$0xff]
        %v484 = vld [vmem:[#allocation5 + $0x38] sm:$0xff]
        %v485 = vld [vmem:[#allocation5 + $0x40] sm:$0xff]
        %v486 = vld [vmem:[#allocation5 + $0x48] sm:$0xff]
        %v487 = vld [vmem:[#allocation5 + $0x50] sm:$0xff]
        %v488 = vld [vmem:[#allocation5 + $0x58] sm:$0xff]
        %v489 = vld [vmem:[#allocation5 + $0x60] sm:$0xff]
        %v490 = vld [vmem:[#allocation5 + $0x68] sm:$0xff]
        %v491 = vld [vmem:[#allocation5 + $0x70] sm:$0xff]
        %v492 = vld [vmem:[#allocation5 + $0x78] sm:$0xff]
        %v493 = vld [vmem:[#allocation5 + $0x80] sm:$0xff]
        %v494 = vld [vmem:[#allocation5 + $0x88] sm:$0xff]
        %v495 = vld [vmem:[#allocation5 + $0x90] sm:$0xff]
        %v496 = vld [vmem:[#allocation5 + $0x98] sm:$0xff]
        %v497 = vld [vmem:[#allocation5 + $0xa0] sm:$0xff]
        %v498 = vld [vmem:[#allocation5 + $0xa8] sm:$0xff]
        %v499 = vld [vmem:[#allocation5 + $0xb0] sm:$0xff]
        %v500 = vld [vmem:[#allocation5 + $0xb8] sm:$0xff]
        %v501 = vld [vmem:[#allocation5 + $0xc0] sm:$0xff]
        %v502 = vld [vmem:[#allocation5 + $0xc8] sm:$0xff]
        %v503 = vld [vmem:[#allocation5 + $0xd0] sm:$0xff]
        %v504 = vld [vmem:[#allocation5 + $0xd8] sm:$0xff]
        %v505 = vld [vmem:[#allocation5 + $0xe0] sm:$0xff]
        %v506 = vld [vmem:[#allocation5 + $0xe8] sm:$0xff]
        %v507 = vld [vmem:[#allocation5 + $0xf0] sm:$0xff]
        %v508 = vld [vmem:[#allocation5 + $0xf8] sm:$0xff]
        %v509 = vld [vmem:[#allocation5 + $0x100] sm:$0xff]
        %v510 = vld [vmem:[#allocation5 + $0x108] sm:$0xff]
        %v511 = vld [vmem:[#allocation5 + $0x110] sm:$0xff]
        %v512 = vld [vmem:[#allocation5 + $0x118] sm:$0xff]
        %v513 = vld [vmem:[#allocation5 + $0x120] sm:$0xff]
        %v514 = vld [vmem:[#allocation5 + $0x128] sm:$0xff]
        %v515 = vld [vmem:[#allocation5 + $0x130] sm:$0xff]
        %v516 = vld [vmem:[#allocation5 + $0x138] sm:$0xff]
        %v517 = vld [vmem:[#allocation5 + $0x140] sm:$0xff]
        %v518 = vld [vmem:[#allocation5 + $0x148] sm:$0xff]
        %v519 = vld [vmem:[#allocation5 + $0x150] sm:$0xff]
        %v520 = vld [vmem:[#allocation5 + $0x158] sm:$0xff]
        %v521 = vld [vmem:[#allocation5 + $0x160] sm:$0xff]
        %v522 = vld [vmem:[#allocation5 + $0x168] sm:$0xff]
        %v523 = vld [vmem:[#allocation5 + $0x170] sm:$0xff]
        %v524 = vld [vmem:[#allocation5 + $0x178] sm:$0xff]
        %v525 = vld [vmem:[#allocation5 + $0x180] sm:$0xff]
        %v526 = vld [vmem:[#allocation5 + $0x188] sm:$0xff]
        %v527 = vld [vmem:[#allocation5 + $0x190] sm:$0xff]
        %v528 = vld [vmem:[#allocation5 + $0x198] sm:$0xff]
        %v529 = vld [vmem:[#allocation5 + $0x1a0] sm:$0xff]
        %v530 = vld [vmem:[#allocation5 + $0x1a8] sm:$0xff]
        %v531 = vld [vmem:[#allocation5 + $0x1b0] sm:$0xff]
        %v532 = vld [vmem:[#allocation5 + $0x1b8] sm:$0xff]
        %v533 = vld [vmem:[#allocation5 + $0x1c0] sm:$0xff]
        %v534 = vld [vmem:[#allocation5 + $0x1c8] sm:$0xff]
        %v535 = vld [vmem:[#allocation5 + $0x1d0] sm:$0xff]
        %v536 = vld [vmem:[#allocation5 + $0x1d8] sm:$0xff]
        %v537 = vld [vmem:[#allocation5 + $0x1e0] sm:$0xff]
        %v538 = vld [vmem:[#allocation5 + $0x1e8] sm:$0xff]
        %v539 = vld [vmem:[#allocation5 + $0x1f0] sm:$0xff]
        %v540 = vld [vmem:[#allocation5 + $0x1f8] sm:$0xff]
        %v541 = vld [vmem:[%s2] sm:$0x3]
        %v543 = vlaneseq
        %v544 = vshrl.u32 %v543, 7
        %v545 = vsub.s32 0, %v544
        %v546 = vrot.slane %v541, %v545
        %v547 = vlaneseq
        %v548 = vshrl.u32 %v547, 7
        %v549 = vsub.s32 1, %v548
        %v550 = vrot.slane %v541, %v549
        %v617 = vunpack.c.l.b16 %v477
        %v618 = vunpack.c.h.b16 %v477
        %v619 = vunpack.c.l.b16 %v478
        %v620 = vunpack.c.h.b16 %v478
        %v621 = vunpack.c.l.b16 %v479
        %v622 = vunpack.c.h.b16 %v479
        %v623 = vunpack.c.l.b16 %v480
        %v624 = vunpack.c.h.b16 %v480
        %v625 = vunpack.c.l.b16 %v481
        %v626 = vunpack.c.h.b16 %v481
        %v627 = vunpack.c.l.b16 %v482
        %v628 = vunpack.c.h.b16 %v482
        %v629 = vunpack.c.l.b16 %v483
        %v630 = vunpack.c.h.b16 %v483
        %v631 = vunpack.c.l.b16 %v484
        %v632 = vunpack.c.h.b16 %v484
        %v633 = vunpack.c.l.b16 %v485
        %v634 = vunpack.c.h.b16 %v485
        %v635 = vunpack.c.l.b16 %v486
        %v636 = vunpack.c.h.b16 %v486
        %v637 = vunpack.c.l.b16 %v487
        %v638 = vunpack.c.h.b16 %v487
        %v639 = vunpack.c.l.b16 %v488
        %v640 = vunpack.c.h.b16 %v488
        %v641 = vunpack.c.l.b16 %v489
        %v642 = vunpack.c.h.b16 %v489
        %v643 = vunpack.c.l.b16 %v490
        %v644 = vunpack.c.h.b16 %v490
        %v645 = vunpack.c.l.b16 %v491
        %v646 = vunpack.c.h.b16 %v491
        %v647 = vunpack.c.l.b16 %v492
        %v648 = vunpack.c.h.b16 %v492
        %v649 = vunpack.c.l.b16 %v493
        %v650 = vunpack.c.h.b16 %v493
        %v651 = vunpack.c.l.b16 %v494
        %v652 = vunpack.c.h.b16 %v494
        %v653 = vunpack.c.l.b16 %v495
        %v654 = vunpack.c.h.b16 %v495
        %v655 = vunpack.c.l.b16 %v496
        %v656 = vunpack.c.h.b16 %v496
        %v657 = vunpack.c.l.b16 %v497
        %v658 = vunpack.c.h.b16 %v497
        %v659 = vunpack.c.l.b16 %v498
        %v660 = vunpack.c.h.b16 %v498
        %v661 = vunpack.c.l.b16 %v499
        %v662 = vunpack.c.h.b16 %v499
        %v663 = vunpack.c.l.b16 %v500
        %v664 = vunpack.c.h.b16 %v500
        %v665 = vunpack.c.l.b16 %v501
        %v666 = vunpack.c.h.b16 %v501
        %v667 = vunpack.c.l.b16 %v502
        %v668 = vunpack.c.h.b16 %v502
        %v669 = vunpack.c.l.b16 %v503
        %v670 = vunpack.c.h.b16 %v503
        %v671 = vunpack.c.l.b16 %v504
        %v672 = vunpack.c.h.b16 %v504
        %v673 = vunpack.c.l.b16 %v505
        %v674 = vunpack.c.h.b16 %v505
        %v675 = vunpack.c.l.b16 %v506
        %v676 = vunpack.c.h.b16 %v506
        %v677 = vunpack.c.l.b16 %v507
        %v678 = vunpack.c.h.b16 %v507
        %v679 = vunpack.c.l.b16 %v508
        %v680 = vunpack.c.h.b16 %v508
        %v681 = vunpack.c.l.b16 %v509
        %v682 = vunpack.c.h.b16 %v509
        %v683 = vunpack.c.l.b16 %v510
        %v684 = vunpack.c.h.b16 %v510
        %v685 = vunpack.c.l.b16 %v511
        %v686 = vunpack.c.h.b16 %v511
        %v687 = vunpack.c.l.b16 %v512
        %v688 = vunpack.c.h.b16 %v512
        %v689 = vunpack.c.l.b16 %v513
        %v690 = vunpack.c.h.b16 %v513
        %v691 = vunpack.c.l.b16 %v514
        %v692 = vunpack.c.h.b16 %v514
        %v693 = vunpack.c.l.b16 %v515
        %v694 = vunpack.c.h.b16 %v515
        %v695 = vunpack.c.l.b16 %v516
        %v696 = vunpack.c.h.b16 %v516
        %v697 = vunpack.c.l.b16 %v517
        %v698 = vunpack.c.h.b16 %v517
        %v699 = vunpack.c.l.b16 %v518
        %v700 = vunpack.c.h.b16 %v518
        %v701 = vunpack.c.l.b16 %v519
        %v702 = vunpack.c.h.b16 %v519
        %v703 = vunpack.c.l.b16 %v520
        %v704 = vunpack.c.h.b16 %v520
        %v705 = vunpack.c.l.b16 %v521
        %v706 = vunpack.c.h.b16 %v521
        %v707 = vunpack.c.l.b16 %v522
        %v708 = vunpack.c.h.b16 %v522
        %v709 = vunpack.c.l.b16 %v523
        %v710 = vunpack.c.h.b16 %v523
        %v711 = vunpack.c.l.b16 %v524
        %v712 = vunpack.c.h.b16 %v524
        %v713 = vunpack.c.l.b16 %v525
        %v714 = vunpack.c.h.b16 %v525
        %v715 = vunpack.c.l.b16 %v526
        %v716 = vunpack.c.h.b16 %v526
        %v717 = vunpack.c.l.b16 %v527
        %v718 = vunpack.c.h.b16 %v527
        %v719 = vunpack.c.l.b16 %v528
        %v720 = vunpack.c.h.b16 %v528
        %v721 = vunpack.c.l.b16 %v529
        %v722 = vunpack.c.h.b16 %v529
        %v723 = vunpack.c.l.b16 %v530
        %v724 = vunpack.c.h.b16 %v530
        %v725 = vunpack.c.l.b16 %v531
        %v726 = vunpack.c.h.b16 %v531
        %v727 = vunpack.c.l.b16 %v532
        %v728 = vunpack.c.h.b16 %v532
        %v729 = vunpack.c.l.b16 %v533
        %v730 = vunpack.c.h.b16 %v533
        %v731 = vunpack.c.l.b16 %v534
        %v732 = vunpack.c.h.b16 %v534
        %v733 = vunpack.c.l.b16 %v535
        %v734 = vunpack.c.h.b16 %v535
        %v735 = vunpack.c.l.b16 %v536
        %v736 = vunpack.c.h.b16 %v536
        %v737 = vunpack.c.l.b16 %v537
        %v738 = vunpack.c.h.b16 %v537
        %v739 = vunpack.c.l.b16 %v538
        %v740 = vunpack.c.h.b16 %v538
        %v741 = vunpack.c.l.b16 %v539
        %v742 = vunpack.c.h.b16 %v539
        %v743 = vunpack.c.l.b16 %v540
        %v744 = vunpack.c.h.b16 %v540
        %v745 = vpack.c.b16 %v619, %v617
        %v746 = vpack.c.b16 %v620, %v618
        %v747 = vpack.c.b16 %v623, %v621
        %v748 = vpack.c.b16 %v624, %v622
        %v749 = vpack.c.b16 %v627, %v625
        %v750 = vpack.c.b16 %v628, %v626
        %v751 = vpack.c.b16 %v631, %v629
        %v752 = vpack.c.b16 %v632, %v630
        %v753 = vpack.c.b16 %v635, %v633
        %v754 = vpack.c.b16 %v636, %v634
        %v755 = vpack.c.b16 %v639, %v637
        %v756 = vpack.c.b16 %v640, %v638
        %v757 = vpack.c.b16 %v643, %v641
        %v758 = vpack.c.b16 %v644, %v642
        %v759 = vpack.c.b16 %v647, %v645
        %v760 = vpack.c.b16 %v648, %v646
        %v761 = vpack.c.b16 %v651, %v649
        %v762 = vpack.c.b16 %v652, %v650
        %v763 = vpack.c.b16 %v655, %v653
        %v764 = vpack.c.b16 %v656, %v654
        %v765 = vpack.c.b16 %v659, %v657
        %v766 = vpack.c.b16 %v660, %v658
        %v767 = vpack.c.b16 %v663, %v661
        %v768 = vpack.c.b16 %v664, %v662
        %v769 = vpack.c.b16 %v667, %v665
        %v770 = vpack.c.b16 %v668, %v666
        %v771 = vpack.c.b16 %v671, %v669
        %v772 = vpack.c.b16 %v672, %v670
        %v773 = vpack.c.b16 %v675, %v673
        %v774 = vpack.c.b16 %v676, %v674
        %v775 = vpack.c.b16 %v679, %v677
        %v776 = vpack.c.b16 %v680, %v678
        %v777 = vpack.c.b16 %v683, %v681
        %v778 = vpack.c.b16 %v684, %v682
        %v779 = vpack.c.b16 %v687, %v685
        %v780 = vpack.c.b16 %v688, %v686
        %v781 = vpack.c.b16 %v691, %v689
        %v782 = vpack.c.b16 %v692, %v690
        %v783 = vpack.c.b16 %v695, %v693
        %v784 = vpack.c.b16 %v696, %v694
        %v785 = vpack.c.b16 %v699, %v697
        %v786 = vpack.c.b16 %v700, %v698
        %v787 = vpack.c.b16 %v703, %v701
        %v788 = vpack.c.b16 %v704, %v702
        %v789 = vpack.c.b16 %v707, %v705
        %v790 = vpack.c.b16 %v708, %v706
        %v791 = vpack.c.b16 %v711, %v709
        %v792 = vpack.c.b16 %v712, %v710
        %v793 = vpack.c.b16 %v715, %v713
        %v794 = vpack.c.b16 %v716, %v714
        %v795 = vpack.c.b16 %v719, %v717
        %v796 = vpack.c.b16 %v720, %v718
        %v797 = vpack.c.b16 %v723, %v721
        %v798 = vpack.c.b16 %v724, %v722
        %v799 = vpack.c.b16 %v727, %v725
        %v800 = vpack.c.b16 %v728, %v726
        %v801 = vpack.c.b16 %v731, %v729
        %v802 = vpack.c.b16 %v732, %v730
        %v803 = vpack.c.b16 %v735, %v733
        %v804 = vpack.c.b16 %v736, %v734
        %v805 = vpack.c.b16 %v739, %v737
        %v806 = vpack.c.b16 %v740, %v738
        %v807 = vpack.c.b16 %v743, %v741
        %v808 = vpack.c.b16 %v744, %v742
        %873 = vmatprep.subr.bf16.mxu0 %v760
        %874 = vmatpush1.bf16.msra.mxu0 %v759
        %875 = vmatprep.subr.bf16.mxu0 %v758
        %876 = vmatpush1.bf16.msra.mxu0 %v757
        %877 = vmatprep.subr.bf16.mxu0 %v756
        %878 = vmatpush1.bf16.msra.mxu0 %v755
        %879 = vmatprep.subr.bf16.mxu0 %v754
        %880 = vmatpush1.bf16.msra.mxu0 %v753
        %881 = vmatprep.subr.bf16.mxu0 %v752
        %882 = vmatpush1.bf16.msra.mxu0 %v751
        %883 = vmatprep.subr.bf16.mxu0 %v750
        %884 = vmatpush1.bf16.msra.mxu0 %v749
        %885 = vmatprep.subr.bf16.mxu0 %v748
        %886 = vmatpush1.bf16.msra.mxu0 %v747
        %887 = vmatprep.subr.bf16.mxu0 %v746
        %888 = vmatpush1.bf16.msra.mxu0 %v745
        %889 = vmatprep.subr.bf16.mxu0 %v776
        %890 = vmatpush2.bf16.msra.mxu0 %v775
        %891 = vmatprep.subr.bf16.mxu0 %v774
        %892 = vmatpush2.bf16.msra.mxu0 %v773
        %893 = vmatprep.subr.bf16.mxu0 %v772
        %894 = vmatpush2.bf16.msra.mxu0 %v771
        %895 = vmatprep.subr.bf16.mxu0 %v770
        %896 = vmatpush2.bf16.msra.mxu0 %v769
        %897 = vmatprep.subr.bf16.mxu0 %v768
        %898 = vmatpush2.bf16.msra.mxu0 %v767
        %899 = vmatprep.subr.bf16.mxu0 %v766
        %900 = vmatpush2.bf16.msra.mxu0 %v765
        %901 = vmatprep.subr.bf16.mxu0 %v764
        %902 = vmatpush2.bf16.msra.mxu0 %v763
        %903 = vmatprep.subr.bf16.mxu0 %v762
        %904 = vmatpush2.bf16.msra.mxu0 %v761
        %905 = vmatprep.mubr.bf16.mxu0 %v430
        %906 = vmatmul.mubr.bf16.gmra.mxu0 %v429
        %v907 = vpop.f32.mrf.mxu0
        %v908 = vadd.f32 %v546, %v907
        %v909 = vpop.f32.mrf.mxu0
        %v910 = vadd.f32 %v550, %v909
        %v911 = vpop.f32.mrf.mxu0
        %v912 = vadd.f32 %v546, %v911
        %v913 = vpop.f32.mrf.mxu0
        %v914 = vadd.f32 %v550, %v913
        %915 = vmatprep.mubr.bf16.mxu0 %v434
        %916 = vmatmul.mubr.bf16.gmra.mxu0 %v433
        %v917 = vpop.f32.mrf.mxu0
        %v918 = vadd.f32 %v546, %v917
        %v919 = vpop.f32.mrf.mxu0
        %v920 = vadd.f32 %v550, %v919
        %v921 = vpop.f32.mrf.mxu0
        %v922 = vadd.f32 %v546, %v921
        %v923 = vpop.f32.mrf.mxu0
        %v924 = vadd.f32 %v550, %v923
        %925 = vmatprep.mubr.bf16.mxu0 %v438
        %926 = vmatmul.mubr.bf16.gmra.mxu0 %v437
        %v927 = vpop.f32.mrf.mxu0
        %v928 = vadd.f32 %v546, %v927
        %v929 = vpop.f32.mrf.mxu0
        %v930 = vadd.f32 %v550, %v929
        %v931 = vpop.f32.mrf.mxu0
        %v932 = vadd.f32 %v546, %v931
        %v933 = vpop.f32.mrf.mxu0
        %v934 = vadd.f32 %v550, %v933
        %935 = vmatprep.mubr.bf16.mxu0 %v442
        %936 = vmatmul.mubr.bf16.gmra.mxu0 %v441
        %v937 = vpop.f32.mrf.mxu0
        %v938 = vadd.f32 %v546, %v937
        %v939 = vpop.f32.mrf.mxu0
        %v940 = vadd.f32 %v550, %v939
        %v941 = vpop.f32.mrf.mxu0
        %v942 = vadd.f32 %v546, %v941
        %v943 = vpop.f32.mrf.mxu0
        %v944 = vadd.f32 %v550, %v943
        %945 = vmatprep.mubr.bf16.mxu0 %v446
        %946 = vmatmul.mubr.bf16.gmra.mxu0 %v445
        %v947 = vpop.f32.mrf.mxu0
        %v948 = vadd.f32 %v546, %v947
        %v949 = vpop.f32.mrf.mxu0
        %v950 = vadd.f32 %v550, %v949
        %v951 = vpop.f32.mrf.mxu0
        %v952 = vadd.f32 %v546, %v951
        %v953 = vpop.f32.mrf.mxu0
        %v954 = vadd.f32 %v550, %v953
        %955 = vmatprep.mubr.bf16.mxu0 %v450
        %956 = vmatmul.mubr.bf16.gmra.mxu0 %v449
        %v957 = vpop.f32.mrf.mxu0
        %v958 = vadd.f32 %v546, %v957
        %v959 = vpop.f32.mrf.mxu0
        %v960 = vadd.f32 %v550, %v959
        %v961 = vpop.f32.mrf.mxu0
        %v962 = vadd.f32 %v546, %v961
        %v963 = vpop.f32.mrf.mxu0
        %v964 = vadd.f32 %v550, %v963
        %965 = vmatprep.mubr.bf16.mxu0 %v454
        %966 = vmatmul.mubr.bf16.gmra.mxu0 %v453
        %v967 = vpop.f32.mrf.mxu0
        %v968 = vadd.f32 %v546, %v967
        %v969 = vpop.f32.mrf.mxu0
        %v970 = vadd.f32 %v550, %v969
        %v971 = vpop.f32.mrf.mxu0
        %v972 = vadd.f32 %v546, %v971
        %v973 = vpop.f32.mrf.mxu0
        %v974 = vadd.f32 %v550, %v973
        %975 = vmatprep.mubr.bf16.mxu0 %v458
        %976 = vmatmul.mubr.bf16.gmra.mxu0 %v457
        %v977 = vpop.f32.mrf.mxu0
        %v978 = vadd.f32 %v546, %v977
        %v979 = vpop.f32.mrf.mxu0
        %v980 = vadd.f32 %v550, %v979
        %v981 = vpop.f32.mrf.mxu0
        %v982 = vadd.f32 %v546, %v981
        %v983 = vpop.f32.mrf.mxu0
        %v984 = vadd.f32 %v550, %v983
        %985 = vmatprep.mubr.bf16.mxu0 %v462
        %986 = vmatmul.mubr.bf16.gmra.mxu0 %v461
        %v987 = vpop.f32.mrf.mxu0
        %v988 = vadd.f32 %v546, %v987
        %v989 = vpop.f32.mrf.mxu0
        %v990 = vadd.f32 %v550, %v989
        %v991 = vpop.f32.mrf.mxu0
        %v992 = vadd.f32 %v546, %v991
        %v993 = vpop.f32.mrf.mxu0
        %v994 = vadd.f32 %v550, %v993
        %995 = vmatprep.mubr.bf16.mxu0 %v466
        %996 = vmatmul.mubr.bf16.gmra.mxu0 %v465
        %v997 = vpop.f32.mrf.mxu0
        %v998 = vadd.f32 %v546, %v997
        %v999 = vpop.f32.mrf.mxu0
        %v1000 = vadd.f32 %v550, %v999
        %v1001 = vpop.f32.mrf.mxu0
        %v1002 = vadd.f32 %v546, %v1001
        %v1003 = vpop.f32.mrf.mxu0
        %v1004 = vadd.f32 %v550, %v1003
        %1005 = vmatprep.mubr.bf16.mxu0 %v470
        %1006 = vmatmul.mubr.bf16.gmra.mxu0 %v469
        %v1007 = vpop.f32.mrf.mxu0
        %v1008 = vadd.f32 %v546, %v1007
        %v1009 = vpop.f32.mrf.mxu0
        %v1010 = vadd.f32 %v550, %v1009
        %v1011 = vpop.f32.mrf.mxu0
        %v1012 = vadd.f32 %v546, %v1011
        %v1013 = vpop.f32.mrf.mxu0
        %v1014 = vadd.f32 %v550, %v1013
        %1015 = vmatprep.mubr.bf16.mxu0 %v474
        %1016 = vmatmul.mubr.bf16.gmra.mxu0 %v473
        %v1017 = vpop.f32.mrf.mxu0
        %v1018 = vadd.f32 %v546, %v1017
        %v1019 = vpop.f32.mrf.mxu0
        %v1020 = vadd.f32 %v550, %v1019
        %v1021 = vpop.f32.mrf.mxu0
        %v1022 = vadd.f32 %v546, %v1021
        %v1023 = vpop.f32.mrf.mxu0
        %v1024 = vadd.f32 %v550, %v1023
        %1025 = vdwg.mxu0
        %1026 = vmatprep.subr.bf16.mxu0 %v792
        %1027 = vmatpush1.bf16.msra.mxu0 %v791
        %1028 = vmatprep.subr.bf16.mxu0 %v790
        %1029 = vmatpush1.bf16.msra.mxu0 %v789
        %1030 = vmatprep.subr.bf16.mxu0 %v788
        %1031 = vmatpush1.bf16.msra.mxu0 %v787
        %1032 = vmatprep.subr.bf16.mxu0 %v786
        %1033 = vmatpush1.bf16.msra.mxu0 %v785
        %1034 = vmatprep.subr.bf16.mxu0 %v784
        %1035 = vmatpush1.bf16.msra.mxu0 %v783
        %1036 = vmatprep.subr.bf16.mxu0 %v782
        %1037 = vmatpush1.bf16.msra.mxu0 %v781
        %1038 = vmatprep.subr.bf16.mxu0 %v780
        %1039 = vmatpush1.bf16.msra.mxu0 %v779
        %1040 = vmatprep.subr.bf16.mxu0 %v778
        %1041 = vmatpush1.bf16.msra.mxu0 %v777
        %1042 = vmatprep.subr.bf16.mxu0 %v808
        %1043 = vmatpush2.bf16.msra.mxu0 %v807
        %1044 = vmatprep.subr.bf16.mxu0 %v806
        %1045 = vmatpush2.bf16.msra.mxu0 %v805
        %1046 = vmatprep.subr.bf16.mxu0 %v804
        %1047 = vmatpush2.bf16.msra.mxu0 %v803
        %1048 = vmatprep.subr.bf16.mxu0 %v802
        %1049 = vmatpush2.bf16.msra.mxu0 %v801
        %1050 = vmatprep.subr.bf16.mxu0 %v800
        %1051 = vmatpush2.bf16.msra.mxu0 %v799
        %1052 = vmatprep.subr.bf16.mxu0 %v798
        %1053 = vmatpush2.bf16.msra.mxu0 %v797
        %1054 = vmatprep.subr.bf16.mxu0 %v796
        %1055 = vmatpush2.bf16.msra.mxu0 %v795
        %1056 = vmatprep.subr.bf16.mxu0 %v794
        %1057 = vmatpush2.bf16.msra.mxu0 %v793
        %1058 = vmatprep.mubr.bf16.mxu0 %v432
        %1059 = vmatmul.mubr.bf16.gmra.mxu0 %v431
        %v1060 = vpop.f32.mrf.mxu0
        %v1061 = vadd.f32 %v908, %v1060
        %v1062 = vpop.f32.mrf.mxu0
        %v1063 = vadd.f32 %v910, %v1062
        %v1064 = vpop.f32.mrf.mxu0
        %v1065 = vadd.f32 %v912, %v1064
        %v1066 = vpop.f32.mrf.mxu0
        %v1067 = vadd.f32 %v914, %v1066
        %1068 = vmatprep.mubr.bf16.mxu0 %v436
        %1069 = vmatmul.mubr.bf16.gmra.mxu0 %v435
        %v1070 = vpop.f32.mrf.mxu0
        %v1071 = vadd.f32 %v918, %v1070
        %v1072 = vpop.f32.mrf.mxu0
        %v1073 = vadd.f32 %v920, %v1072
        %v1074 = vpop.f32.mrf.mxu0
        %v1075 = vadd.f32 %v922, %v1074
        %v1076 = vpop.f32.mrf.mxu0
        %v1077 = vadd.f32 %v924, %v1076
        %1078 = vmatprep.mubr.bf16.mxu0 %v440
        %1079 = vmatmul.mubr.bf16.gmra.mxu0 %v439
        %v1080 = vpop.f32.mrf.mxu0
        %v1081 = vadd.f32 %v928, %v1080
        %v1082 = vpop.f32.mrf.mxu0
        %v1083 = vadd.f32 %v930, %v1082
        %v1084 = vpop.f32.mrf.mxu0
        %v1085 = vadd.f32 %v932, %v1084
        %v1086 = vpop.f32.mrf.mxu0
        %v1087 = vadd.f32 %v934, %v1086
        %1088 = vmatprep.mubr.bf16.mxu0 %v444
        %1089 = vmatmul.mubr.bf16.gmra.mxu0 %v443
        %v1090 = vpop.f32.mrf.mxu0
        %v1091 = vadd.f32 %v938, %v1090
        %v1092 = vpop.f32.mrf.mxu0
        %v1093 = vadd.f32 %v940, %v1092
        %v1094 = vpop.f32.mrf.mxu0
        %v1095 = vadd.f32 %v942, %v1094
        %v1096 = vpop.f32.mrf.mxu0
        %v1097 = vadd.f32 %v944, %v1096
        %1098 = vmatprep.mubr.bf16.mxu0 %v448
        %1099 = vmatmul.mubr.bf16.gmra.mxu0 %v447
        %v1100 = vpop.f32.mrf.mxu0
        %v1101 = vadd.f32 %v948, %v1100
        %v1102 = vpop.f32.mrf.mxu0
        %v1103 = vadd.f32 %v950, %v1102
        %v1104 = vpop.f32.mrf.mxu0
        %v1105 = vadd.f32 %v952, %v1104
        %v1106 = vpop.f32.mrf.mxu0
        %v1107 = vadd.f32 %v954, %v1106
        %1108 = vmatprep.mubr.bf16.mxu0 %v452
        %1109 = vmatmul.mubr.bf16.gmra.mxu0 %v451
        %v1110 = vpop.f32.mrf.mxu0
        %v1111 = vadd.f32 %v958, %v1110
        %v1112 = vpop.f32.mrf.mxu0
        %v1113 = vadd.f32 %v960, %v1112
        %v1114 = vpop.f32.mrf.mxu0
        %v1115 = vadd.f32 %v962, %v1114
        %v1116 = vpop.f32.mrf.mxu0
        %v1117 = vadd.f32 %v964, %v1116
        %1118 = vmatprep.mubr.bf16.mxu0 %v456
        %1119 = vmatmul.mubr.bf16.gmra.mxu0 %v455
        %v1120 = vpop.f32.mrf.mxu0
        %v1121 = vadd.f32 %v968, %v1120
        %v1122 = vpop.f32.mrf.mxu0
        %v1123 = vadd.f32 %v970, %v1122
        %v1124 = vpop.f32.mrf.mxu0
        %v1125 = vadd.f32 %v972, %v1124
        %v1126 = vpop.f32.mrf.mxu0
        %v1127 = vadd.f32 %v974, %v1126
        %1128 = vmatprep.mubr.bf16.mxu0 %v460
        %1129 = vmatmul.mubr.bf16.gmra.mxu0 %v459
        %v1130 = vpop.f32.mrf.mxu0
        %v1131 = vadd.f32 %v978, %v1130
        %v1132 = vpop.f32.mrf.mxu0
        %v1133 = vadd.f32 %v980, %v1132
        %v1134 = vpop.f32.mrf.mxu0
        %v1135 = vadd.f32 %v982, %v1134
        %v1136 = vpop.f32.mrf.mxu0
        %v1137 = vadd.f32 %v984, %v1136
        %1138 = vmatprep.mubr.bf16.mxu0 %v464
        %1139 = vmatmul.mubr.bf16.gmra.mxu0 %v463
        %v1140 = vpop.f32.mrf.mxu0
        %v1141 = vadd.f32 %v988, %v1140
        %v1142 = vpop.f32.mrf.mxu0
        %v1143 = vadd.f32 %v990, %v1142
        %v1144 = vpop.f32.mrf.mxu0
        %v1145 = vadd.f32 %v992, %v1144
        %v1146 = vpop.f32.mrf.mxu0
        %v1147 = vadd.f32 %v994, %v1146
        %1148 = vmatprep.mubr.bf16.mxu0 %v468
        %1149 = vmatmul.mubr.bf16.gmra.mxu0 %v467
        %v1150 = vpop.f32.mrf.mxu0
        %v1151 = vadd.f32 %v998, %v1150
        %v1152 = vpop.f32.mrf.mxu0
        %v1153 = vadd.f32 %v1000, %v1152
        %v1154 = vpop.f32.mrf.mxu0
        %v1155 = vadd.f32 %v1002, %v1154
        %v1156 = vpop.f32.mrf.mxu0
        %v1157 = vadd.f32 %v1004, %v1156
        %1158 = vmatprep.mubr.bf16.mxu0 %v472
        %1159 = vmatmul.mubr.bf16.gmra.mxu0 %v471
        %v1160 = vpop.f32.mrf.mxu0
        %v1161 = vadd.f32 %v1008, %v1160
        %v1162 = vpop.f32.mrf.mxu0
        %v1163 = vadd.f32 %v1010, %v1162
        %v1164 = vpop.f32.mrf.mxu0
        %v1165 = vadd.f32 %v1012, %v1164
        %v1166 = vpop.f32.mrf.mxu0
        %v1167 = vadd.f32 %v1014, %v1166
        %1168 = vmatprep.mubr.bf16.mxu0 %v476
        %1169 = vmatmul.mubr.bf16.gmra.mxu0 %v475
        %v1170 = vpop.f32.mrf.mxu0
        %v1171 = vadd.f32 %v1018, %v1170
        %v1172 = vpop.f32.mrf.mxu0
        %v1173 = vadd.f32 %v1020, %v1172
        %v1174 = vpop.f32.mrf.mxu0
        %v1175 = vadd.f32 %v1022, %v1174
        %v1176 = vpop.f32.mrf.mxu0
        %v1177 = vadd.f32 %v1024, %v1176
        %1178 = vdwg.mxu0
        %vm1179 = vcmp.gt.f32.partialorder %v1061, 0.0
        %vm1180 = vcmp.gt.f32.partialorder %v1063, 0.0
        %vm1181 = vcmp.gt.f32.partialorder %v1065, 0.0
        %vm1182 = vcmp.gt.f32.partialorder %v1067, 0.0
        %vm1183 = vcmp.gt.f32.partialorder %v1071, 0.0
        %vm1184 = vcmp.gt.f32.partialorder %v1073, 0.0
        %vm1185 = vcmp.gt.f32.partialorder %v1075, 0.0
        %vm1186 = vcmp.gt.f32.partialorder %v1077, 0.0
        %vm1187 = vcmp.gt.f32.partialorder %v1081, 0.0
        %vm1188 = vcmp.gt.f32.partialorder %v1083, 0.0
        %vm1189 = vcmp.gt.f32.partialorder %v1085, 0.0
        %vm1190 = vcmp.gt.f32.partialorder %v1087, 0.0
        %vm1191 = vcmp.gt.f32.partialorder %v1091, 0.0
        %vm1192 = vcmp.gt.f32.partialorder %v1093, 0.0
        %vm1193 = vcmp.gt.f32.partialorder %v1095, 0.0
        %vm1194 = vcmp.gt.f32.partialorder %v1097, 0.0
        %vm1195 = vcmp.gt.f32.partialorder %v1101, 0.0
        %vm1196 = vcmp.gt.f32.partialorder %v1103, 0.0
        %vm1197 = vcmp.gt.f32.partialorder %v1105, 0.0
        %vm1198 = vcmp.gt.f32.partialorder %v1107, 0.0
        %vm1199 = vcmp.gt.f32.partialorder %v1111, 0.0
        %vm1200 = vcmp.gt.f32.partialorder %v1113, 0.0
        %vm1201 = vcmp.gt.f32.partialorder %v1115, 0.0
        %vm1202 = vcmp.gt.f32.partialorder %v1117, 0.0
        %vm1203 = vcmp.gt.f32.partialorder %v1121, 0.0
        %vm1204 = vcmp.gt.f32.partialorder %v1123, 0.0
        %vm1205 = vcmp.gt.f32.partialorder %v1125, 0.0
        %vm1206 = vcmp.gt.f32.partialorder %v1127, 0.0
        %vm1207 = vcmp.gt.f32.partialorder %v1131, 0.0
        %vm1208 = vcmp.gt.f32.partialorder %v1133, 0.0
        %vm1209 = vcmp.gt.f32.partialorder %v1135, 0.0
        %vm1210 = vcmp.gt.f32.partialorder %v1137, 0.0
        %vm1211 = vcmp.gt.f32.partialorder %v1141, 0.0
        %vm1212 = vcmp.gt.f32.partialorder %v1143, 0.0
        %vm1213 = vcmp.gt.f32.partialorder %v1145, 0.0
        %vm1214 = vcmp.gt.f32.partialorder %v1147, 0.0
        %vm1215 = vcmp.gt.f32.partialorder %v1151, 0.0
        %vm1216 = vcmp.gt.f32.partialorder %v1153, 0.0
        %vm1217 = vcmp.gt.f32.partialorder %v1155, 0.0
        %vm1218 = vcmp.gt.f32.partialorder %v1157, 0.0
        %vm1219 = vcmp.gt.f32.partialorder %v1161, 0.0
        %vm1220 = vcmp.gt.f32.partialorder %v1163, 0.0
        %vm1221 = vcmp.gt.f32.partialorder %v1165, 0.0
        %vm1222 = vcmp.gt.f32.partialorder %v1167, 0.0
        %vm1223 = vcmp.gt.f32.partialorder %v1171, 0.0
        %vm1224 = vcmp.gt.f32.partialorder %v1173, 0.0
        %vm1225 = vcmp.gt.f32.partialorder %v1175, 0.0
        %vm1226 = vcmp.gt.f32.partialorder %v1177, 0.0
        %v1227 = vmul.f32 %v1061, 0.2
        %v1228 = vmul.f32 %v1063, 0.2
        %v1229 = vmul.f32 %v1065, 0.2
        %v1230 = vmul.f32 %v1067, 0.2
        %v1231 = vmul.f32 %v1071, 0.2
        %v1232 = vmul.f32 %v1073, 0.2
        %v1233 = vmul.f32 %v1075, 0.2
        %v1234 = vmul.f32 %v1077, 0.2
        %v1235 = vmul.f32 %v1081, 0.2
        %v1236 = vmul.f32 %v1083, 0.2
        %v1237 = vmul.f32 %v1085, 0.2
        %v1238 = vmul.f32 %v1087, 0.2
        %v1239 = vmul.f32 %v1091, 0.2
        %v1240 = vmul.f32 %v1093, 0.2
        %v1241 = vmul.f32 %v1095, 0.2
        %v1242 = vmul.f32 %v1097, 0.2
        %v1243 = vmul.f32 %v1101, 0.2
        %v1244 = vmul.f32 %v1103, 0.2
        %v1245 = vmul.f32 %v1105, 0.2
        %v1246 = vmul.f32 %v1107, 0.2
        %v1247 = vmul.f32 %v1111, 0.2
        %v1248 = vmul.f32 %v1113, 0.2
        %v1249 = vmul.f32 %v1115, 0.2
        %v1250 = vmul.f32 %v1117, 0.2
        %v1251 = vmul.f32 %v1121, 0.2
        %v1252 = vmul.f32 %v1123, 0.2
        %v1253 = vmul.f32 %v1125, 0.2
        %v1254 = vmul.f32 %v1127, 0.2
        %v1255 = vmul.f32 %v1131, 0.2
        %v1256 = vmul.f32 %v1133, 0.2
        %v1257 = vmul.f32 %v1135, 0.2
        %v1258 = vmul.f32 %v1137, 0.2
        %v1259 = vmul.f32 %v1141, 0.2
        %v1260 = vmul.f32 %v1143, 0.2
        %v1261 = vmul.f32 %v1145, 0.2
        %v1262 = vmul.f32 %v1147, 0.2
        %v1263 = vmul.f32 %v1151, 0.2
        %v1264 = vmul.f32 %v1153, 0.2
        %v1265 = vmul.f32 %v1155, 0.2
        %v1266 = vmul.f32 %v1157, 0.2
        %v1267 = vmul.f32 %v1161, 0.2
        %v1268 = vmul.f32 %v1163, 0.2
        %v1269 = vmul.f32 %v1165, 0.2
        %v1270 = vmul.f32 %v1167, 0.2
        %v1271 = vmul.f32 %v1171, 0.2
        %v1272 = vmul.f32 %v1173, 0.2
        %v1273 = vmul.f32 %v1175, 0.2
        %v1274 = vmul.f32 %v1177, 0.2
        %v1275 = vsel %vm1179, %v1061, %v1227
        %v1276 = vsel %vm1180, %v1063, %v1228
        %v1277 = vsel %vm1181, %v1065, %v1229
        %v1278 = vsel %vm1182, %v1067, %v1230
        %v1279 = vsel %vm1183, %v1071, %v1231
        %v1280 = vsel %vm1184, %v1073, %v1232
        %v1281 = vsel %vm1185, %v1075, %v1233
        %v1282 = vsel %vm1186, %v1077, %v1234
        %v1283 = vsel %vm1187, %v1081, %v1235
        %v1284 = vsel %vm1188, %v1083, %v1236
        %v1285 = vsel %vm1189, %v1085, %v1237
        %v1286 = vsel %vm1190, %v1087, %v1238
        %v1287 = vsel %vm1191, %v1091, %v1239
        %v1288 = vsel %vm1192, %v1093, %v1240
        %v1289 = vsel %vm1193, %v1095, %v1241
        %v1290 = vsel %vm1194, %v1097, %v1242
        %v1291 = vsel %vm1195, %v1101, %v1243
        %v1292 = vsel %vm1196, %v1103, %v1244
        %v1293 = vsel %vm1197, %v1105, %v1245
        %v1294 = vsel %vm1198, %v1107, %v1246
        %v1295 = vsel %vm1199, %v1111, %v1247
        %v1296 = vsel %vm1200, %v1113, %v1248
        %v1297 = vsel %vm1201, %v1115, %v1249
        %v1298 = vsel %vm1202, %v1117, %v1250
        %v1299 = vsel %vm1203, %v1121, %v1251
        %v1300 = vsel %vm1204, %v1123, %v1252
        %v1301 = vsel %vm1205, %v1125, %v1253
        %v1302 = vsel %vm1206, %v1127, %v1254
        %v1303 = vsel %vm1207, %v1131, %v1255
        %v1304 = vsel %vm1208, %v1133, %v1256
        %v1305 = vsel %vm1209, %v1135, %v1257
        %v1306 = vsel %vm1210, %v1137, %v1258
        %v1307 = vsel %vm1211, %v1141, %v1259
        %v1308 = vsel %vm1212, %v1143, %v1260
        %v1309 = vsel %vm1213, %v1145, %v1261
        %v1310 = vsel %vm1214, %v1147, %v1262
        %v1311 = vsel %vm1215, %v1151, %v1263
        %v1312 = vsel %vm1216, %v1153, %v1264
        %v1313 = vsel %vm1217, %v1155, %v1265
        %v1314 = vsel %vm1218, %v1157, %v1266
        %v1315 = vsel %vm1219, %v1161, %v1267
        %v1316 = vsel %vm1220, %v1163, %v1268
        %v1317 = vsel %vm1221, %v1165, %v1269
        %v1318 = vsel %vm1222, %v1167, %v1270
        %v1319 = vsel %vm1223, %v1171, %v1271
        %v1320 = vsel %vm1224, %v1173, %v1272
        %v1321 = vsel %vm1225, %v1175, %v1273
        %v1322 = vsel %vm1226, %v1177, %v1274
        %v1323 = vpack.c.bf16 %v1277, %v1275
        %v1324 = vpack.c.bf16 %v1278, %v1276
        %v1325 = vpack.c.bf16 %v1281, %v1279
        %v1326 = vpack.c.bf16 %v1282, %v1280
        %v1327 = vpack.c.bf16 %v1285, %v1283
        %v1328 = vpack.c.bf16 %v1286, %v1284
        %v1329 = vpack.c.bf16 %v1289, %v1287
        %v1330 = vpack.c.bf16 %v1290, %v1288
        %v1331 = vpack.c.bf16 %v1293, %v1291
        %v1332 = vpack.c.bf16 %v1294, %v1292
        %v1333 = vpack.c.bf16 %v1297, %v1295
        %v1334 = vpack.c.bf16 %v1298, %v1296
        %v1335 = vpack.c.bf16 %v1301, %v1299
        %v1336 = vpack.c.bf16 %v1302, %v1300
        %v1337 = vpack.c.bf16 %v1305, %v1303
        %v1338 = vpack.c.bf16 %v1306, %v1304
        %v1339 = vpack.c.bf16 %v1309, %v1307
        %v1340 = vpack.c.bf16 %v1310, %v1308
        %v1341 = vpack.c.bf16 %v1313, %v1311
        %v1342 = vpack.c.bf16 %v1314, %v1312
        %v1343 = vpack.c.bf16 %v1317, %v1315
        %v1344 = vpack.c.bf16 %v1318, %v1316
        %v1345 = vpack.c.bf16 %v1321, %v1319
        %v1346 = vpack.c.bf16 %v1322, %v1320
        %v1347 = vld [vmem:[#allocation7] sm:$0xf]
        %v1348 = vld [vmem:[#allocation7 + $0x4] sm:$0xf]
        %v1349 = vld [vmem:[#allocation7 + $0x8] sm:$0xf]
        %v1350 = vld [vmem:[#allocation7 + $0xc] sm:$0xf]
        %v1351 = vld [vmem:[#allocation7 + $0x10] sm:$0xf]
        %v1352 = vld [vmem:[#allocation7 + $0x14] sm:$0xf]
        %v1353 = vld [vmem:[#allocation7 + $0x18] sm:$0xf]
        %v1354 = vld [vmem:[#allocation7 + $0x1c] sm:$0xf]
        %v1355 = vld [vmem:[#allocation7 + $0x20] sm:$0xf]
        %v1356 = vld [vmem:[#allocation7 + $0x24] sm:$0xf]
        %v1357 = vld [vmem:[#allocation7 + $0x28] sm:$0xf]
        %v1358 = vld [vmem:[#allocation7 + $0x2c] sm:$0xf]
        %v1359 = vld [vmem:[#allocation7 + $0x30] sm:$0xf]
        %v1360 = vld [vmem:[#allocation7 + $0x34] sm:$0xf]
        %v1361 = vld [vmem:[#allocation7 + $0x38] sm:$0xf]
        %v1362 = vld [vmem:[#allocation7 + $0x3c] sm:$0xf]
        %v1363 = vld [vmem:[#allocation7 + $0x40] sm:$0xf]
        %v1364 = vld [vmem:[#allocation7 + $0x44] sm:$0xf]
        %v1365 = vld [vmem:[#allocation7 + $0x48] sm:$0xf]
        %v1366 = vld [vmem:[#allocation7 + $0x4c] sm:$0xf]
        %v1367 = vld [vmem:[#allocation7 + $0x50] sm:$0xf]
        %v1368 = vld [vmem:[#allocation7 + $0x54] sm:$0xf]
        %v1369 = vld [vmem:[#allocation7 + $0x58] sm:$0xf]
        %v1370 = vld [vmem:[#allocation7 + $0x5c] sm:$0xf]
        %v1371 = vld [vmem:[#allocation7 + $0x60] sm:$0xf]
        %v1372 = vld [vmem:[#allocation7 + $0x64] sm:$0xf]
        %v1373 = vld [vmem:[#allocation7 + $0x68] sm:$0xf]
        %v1374 = vld [vmem:[#allocation7 + $0x6c] sm:$0xf]
        %v1375 = vld [vmem:[#allocation7 + $0x70] sm:$0xf]
        %v1376 = vld [vmem:[#allocation7 + $0x74] sm:$0xf]
        %v1377 = vld [vmem:[#allocation7 + $0x78] sm:$0xf]
        %v1378 = vld [vmem:[#allocation7 + $0x7c] sm:$0xf]
        %v1379 = vld [vmem:[%s4] sm:$0x1]
        %v1381 = vlaneseq
        %v1382 = vshrl.u32 %v1381, 7
        %v1383 = vsub.s32 0, %v1382
        %v1384 = vrot.slane %v1379, %v1383
        %v1418 = vunpack.c.l.b16 %v1347
        %v1419 = vunpack.c.l.b16 %v1348
        %v1420 = vunpack.c.l.b16 %v1349
        %v1421 = vunpack.c.l.b16 %v1350
        %v1422 = vunpack.c.l.b16 %v1351
        %v1423 = vunpack.c.l.b16 %v1352
        %v1424 = vunpack.c.l.b16 %v1353
        %v1425 = vunpack.c.l.b16 %v1354
        %v1426 = vunpack.c.l.b16 %v1355
        %v1427 = vunpack.c.l.b16 %v1356
        %v1428 = vunpack.c.l.b16 %v1357
        %v1429 = vunpack.c.l.b16 %v1358
        %v1430 = vunpack.c.l.b16 %v1359
        %v1431 = vunpack.c.l.b16 %v1360
        %v1432 = vunpack.c.l.b16 %v1361
        %v1433 = vunpack.c.l.b16 %v1362
        %v1434 = vunpack.c.l.b16 %v1363
        %v1435 = vunpack.c.l.b16 %v1364
        %v1436 = vunpack.c.l.b16 %v1365
        %v1437 = vunpack.c.l.b16 %v1366
        %v1438 = vunpack.c.l.b16 %v1367
        %v1439 = vunpack.c.l.b16 %v1368
        %v1440 = vunpack.c.l.b16 %v1369
        %v1441 = vunpack.c.l.b16 %v1370
        %v1442 = vunpack.c.l.b16 %v1371
        %v1443 = vunpack.c.l.b16 %v1372
        %v1444 = vunpack.c.l.b16 %v1373
        %v1445 = vunpack.c.l.b16 %v1374
        %v1446 = vunpack.c.l.b16 %v1375
        %v1447 = vunpack.c.l.b16 %v1376
        %v1448 = vunpack.c.l.b16 %v1377
        %v1449 = vunpack.c.l.b16 %v1378
        %v1450 = vpack.c.b16 %v1419, %v1418
        %v1451 = vpack.c.b16 %v1421, %v1420
        %v1452 = vpack.c.b16 %v1423, %v1422
        %v1453 = vpack.c.b16 %v1425, %v1424
        %v1454 = vpack.c.b16 %v1427, %v1426
        %v1455 = vpack.c.b16 %v1429, %v1428
        %v1456 = vpack.c.b16 %v1431, %v1430
        %v1457 = vpack.c.b16 %v1433, %v1432
        %v1458 = vpack.c.b16 %v1435, %v1434
        %v1459 = vpack.c.b16 %v1437, %v1436
        %v1460 = vpack.c.b16 %v1439, %v1438
        %v1461 = vpack.c.b16 %v1441, %v1440
        %v1462 = vpack.c.b16 %v1443, %v1442
        %v1463 = vpack.c.b16 %v1445, %v1444
        %v1464 = vpack.c.b16 %v1447, %v1446
        %v1465 = vpack.c.b16 %v1449, %v1448
        %1482 = vmatprep.subr.bf16.mxu0 0
        %1483 = vmatpush1.bf16.msra.mxu0 %v1457
        %1484 = vmatprep.subr.bf16.mxu0 0
        %1485 = vmatpush1.bf16.msra.mxu0 %v1456
        %1486 = vmatprep.subr.bf16.mxu0 0
        %1487 = vmatpush1.bf16.msra.mxu0 %v1455
        %1488 = vmatprep.subr.bf16.mxu0 0
        %1489 = vmatpush1.bf16.msra.mxu0 %v1454
        %1490 = vmatprep.subr.bf16.mxu0 0
        %1491 = vmatpush1.bf16.msra.mxu0 %v1453
        %1492 = vmatprep.subr.bf16.mxu0 0
        %1493 = vmatpush1.bf16.msra.mxu0 %v1452
        %1494 = vmatprep.subr.bf16.mxu0 0
        %1495 = vmatpush1.bf16.msra.mxu0 %v1451
        %1496 = vmatprep.subr.bf16.mxu0 0
        %1497 = vmatpush1.bf16.msra.mxu0 %v1450
        %1498 = vmatprep.subr.bf16.mxu0 0
        %1499 = vmatpush2.bf16.msra.mxu0 %v1465
        %1500 = vmatprep.subr.bf16.mxu0 0
        %1501 = vmatpush2.bf16.msra.mxu0 %v1464
        %1502 = vmatprep.subr.bf16.mxu0 0
        %1503 = vmatpush2.bf16.msra.mxu0 %v1463
        %1504 = vmatprep.subr.bf16.mxu0 0
        %1505 = vmatpush2.bf16.msra.mxu0 %v1462
        %1506 = vmatprep.subr.bf16.mxu0 0
        %1507 = vmatpush2.bf16.msra.mxu0 %v1461
        %1508 = vmatprep.subr.bf16.mxu0 0
        %1509 = vmatpush2.bf16.msra.mxu0 %v1460
        %1510 = vmatprep.subr.bf16.mxu0 0
        %1511 = vmatpush2.bf16.msra.mxu0 %v1459
        %1512 = vmatprep.subr.bf16.mxu0 0
        %1513 = vmatpush2.bf16.msra.mxu0 %v1458
        %1514 = vmatprep.mubr.bf16.mxu0 %v1324
        %1515 = vmatmul.mubr.bf16.gmra.mxu0 %v1323
        %v1516 = vpop.f32.mrf.mxu0
        %v1517 = vadd.f32 %v1384, %v1516
        %v1518 = vpop.f32.mrf.mxu0
        %v1519 = vpop.f32.mrf.mxu0
        %v1520 = vadd.f32 %v1384, %v1519
        %v1521 = vpop.f32.mrf.mxu0
        %1522 = vmatprep.mubr.bf16.mxu0 %v1326
        %1523 = vmatmul.mubr.bf16.gmra.mxu0 %v1325
        %v1524 = vpop.f32.mrf.mxu0
        %v1525 = vadd.f32 %v1384, %v1524
        %v1526 = vpop.f32.mrf.mxu0
        %v1527 = vpop.f32.mrf.mxu0
        %v1528 = vadd.f32 %v1384, %v1527
        %v1529 = vpop.f32.mrf.mxu0
        %1530 = vmatprep.mubr.bf16.mxu0 %v1328
        %1531 = vmatmul.mubr.bf16.gmra.mxu0 %v1327
        %v1532 = vpop.f32.mrf.mxu0
        %v1533 = vadd.f32 %v1384, %v1532
        %v1534 = vpop.f32.mrf.mxu0
        %v1535 = vpop.f32.mrf.mxu0
        %v1536 = vadd.f32 %v1384, %v1535
        %v1537 = vpop.f32.mrf.mxu0
        %1538 = vmatprep.mubr.bf16.mxu0 %v1330
        %1539 = vmatmul.mubr.bf16.gmra.mxu0 %v1329
        %v1540 = vpop.f32.mrf.mxu0
        %v1541 = vadd.f32 %v1384, %v1540
        %v1542 = vpop.f32.mrf.mxu0
        %v1543 = vpop.f32.mrf.mxu0
        %v1544 = vadd.f32 %v1384, %v1543
        %v1545 = vpop.f32.mrf.mxu0
        %1546 = vmatprep.mubr.bf16.mxu0 %v1332
        %1547 = vmatmul.mubr.bf16.gmra.mxu0 %v1331
        %v1548 = vpop.f32.mrf.mxu0
        %v1549 = vadd.f32 %v1384, %v1548
        %v1550 = vpop.f32.mrf.mxu0
        %v1551 = vpop.f32.mrf.mxu0
        %v1552 = vadd.f32 %v1384, %v1551
        %v1553 = vpop.f32.mrf.mxu0
        %1554 = vmatprep.mubr.bf16.mxu0 %v1334
        %1555 = vmatmul.mubr.bf16.gmra.mxu0 %v1333
        %v1556 = vpop.f32.mrf.mxu0
        %v1557 = vadd.f32 %v1384, %v1556
        %v1558 = vpop.f32.mrf.mxu0
        %v1559 = vpop.f32.mrf.mxu0
        %v1560 = vadd.f32 %v1384, %v1559
        %v1561 = vpop.f32.mrf.mxu0
        %1562 = vmatprep.mubr.bf16.mxu0 %v1336
        %1563 = vmatmul.mubr.bf16.gmra.mxu0 %v1335
        %v1564 = vpop.f32.mrf.mxu0
        %v1565 = vadd.f32 %v1384, %v1564
        %v1566 = vpop.f32.mrf.mxu0
        %v1567 = vpop.f32.mrf.mxu0
        %v1568 = vadd.f32 %v1384, %v1567
        %v1569 = vpop.f32.mrf.mxu0
        %1570 = vmatprep.mubr.bf16.mxu0 %v1338
        %1571 = vmatmul.mubr.bf16.gmra.mxu0 %v1337
        %v1572 = vpop.f32.mrf.mxu0
        %v1573 = vadd.f32 %v1384, %v1572
        %v1574 = vpop.f32.mrf.mxu0
        %v1575 = vpop.f32.mrf.mxu0
        %v1576 = vadd.f32 %v1384, %v1575
        %v1577 = vpop.f32.mrf.mxu0
        %1578 = vmatprep.mubr.bf16.mxu0 %v1340
        %1579 = vmatmul.mubr.bf16.gmra.mxu0 %v1339
        %v1580 = vpop.f32.mrf.mxu0
        %v1581 = vadd.f32 %v1384, %v1580
        %v1582 = vpop.f32.mrf.mxu0
        %v1583 = vpop.f32.mrf.mxu0
        %v1584 = vadd.f32 %v1384, %v1583
        %v1585 = vpop.f32.mrf.mxu0
        %1586 = vmatprep.mubr.bf16.mxu0 %v1342
        %1587 = vmatmul.mubr.bf16.gmra.mxu0 %v1341
        %v1588 = vpop.f32.mrf.mxu0
        %v1589 = vadd.f32 %v1384, %v1588
        %v1590 = vpop.f32.mrf.mxu0
        %v1591 = vpop.f32.mrf.mxu0
        %v1592 = vadd.f32 %v1384, %v1591
        %v1593 = vpop.f32.mrf.mxu0
        %1594 = vmatprep.mubr.bf16.mxu0 %v1344
        %1595 = vmatmul.mubr.bf16.gmra.mxu0 %v1343
        %v1596 = vpop.f32.mrf.mxu0
        %v1597 = vadd.f32 %v1384, %v1596
        %v1598 = vpop.f32.mrf.mxu0
        %v1599 = vpop.f32.mrf.mxu0
        %v1600 = vadd.f32 %v1384, %v1599
        %v1601 = vpop.f32.mrf.mxu0
        %1602 = vmatprep.mubr.bf16.mxu0 %v1346
        %1603 = vmatmul.mubr.bf16.gmra.mxu0 %v1345
        %v1604 = vpop.f32.mrf.mxu0
        %v1605 = vadd.f32 %v1384, %v1604
        %v1606 = vpop.f32.mrf.mxu0
        %v1607 = vpop.f32.mrf.mxu0
        %v1608 = vadd.f32 %v1384, %v1607
        %v1609 = vpop.f32.mrf.mxu0
        %1610 = vdwg.mxu0
        %vm1611 = vcmp.gt.f32.partialorder %v1517, 0.0
        %vm1612 = vcmp.gt.f32.partialorder %v1520, 0.0
        %vm1613 = vcmp.gt.f32.partialorder %v1525, 0.0
        %vm1614 = vcmp.gt.f32.partialorder %v1528, 0.0
        %vm1615 = vcmp.gt.f32.partialorder %v1533, 0.0
        %vm1616 = vcmp.gt.f32.partialorder %v1536, 0.0
        %vm1617 = vcmp.gt.f32.partialorder %v1541, 0.0
        %vm1618 = vcmp.gt.f32.partialorder %v1544, 0.0
        %vm1619 = vcmp.gt.f32.partialorder %v1549, 0.0
        %vm1620 = vcmp.gt.f32.partialorder %v1552, 0.0
        %vm1621 = vcmp.gt.f32.partialorder %v1557, 0.0
        %vm1622 = vcmp.gt.f32.partialorder %v1560, 0.0
        %vm1623 = vcmp.gt.f32.partialorder %v1565, 0.0
        %vm1624 = vcmp.gt.f32.partialorder %v1568, 0.0
        %vm1625 = vcmp.gt.f32.partialorder %v1573, 0.0
        %vm1626 = vcmp.gt.f32.partialorder %v1576, 0.0
        %vm1627 = vcmp.gt.f32.partialorder %v1581, 0.0
        %vm1628 = vcmp.gt.f32.partialorder %v1584, 0.0
        %vm1629 = vcmp.gt.f32.partialorder %v1589, 0.0
        %vm1630 = vcmp.gt.f32.partialorder %v1592, 0.0
        %vm1631 = vcmp.gt.f32.partialorder %v1597, 0.0
        %vm1632 = vcmp.gt.f32.partialorder %v1600, 0.0
        %vm1633 = vcmp.gt.f32.partialorder %v1605, 0.0
        %vm1634 = vcmp.gt.f32.partialorder %v1608, 0.0
        %v1635 = vmul.f32 %v1517, 0.2
        %v1636 = vmul.f32 %v1520, 0.2
        %v1637 = vmul.f32 %v1525, 0.2
        %v1638 = vmul.f32 %v1528, 0.2
        %v1639 = vmul.f32 %v1533, 0.2
        %v1640 = vmul.f32 %v1536, 0.2
        %v1641 = vmul.f32 %v1541, 0.2
        %v1642 = vmul.f32 %v1544, 0.2
        %v1643 = vmul.f32 %v1549, 0.2
        %v1644 = vmul.f32 %v1552, 0.2
        %v1645 = vmul.f32 %v1557, 0.2
        %v1646 = vmul.f32 %v1560, 0.2
        %v1647 = vmul.f32 %v1565, 0.2
        %v1648 = vmul.f32 %v1568, 0.2
        %v1649 = vmul.f32 %v1573, 0.2
        %v1650 = vmul.f32 %v1576, 0.2
        %v1651 = vmul.f32 %v1581, 0.2
        %v1652 = vmul.f32 %v1584, 0.2
        %v1653 = vmul.f32 %v1589, 0.2
        %v1654 = vmul.f32 %v1592, 0.2
        %v1655 = vmul.f32 %v1597, 0.2
        %v1656 = vmul.f32 %v1600, 0.2
        %v1657 = vmul.f32 %v1605, 0.2
        %v1658 = vmul.f32 %v1608, 0.2
        %v1659 = vsel %vm1611, %v1517, %v1635
        %v1660 = vsel %vm1612, %v1520, %v1636
        %v1661 = vsel %vm1613, %v1525, %v1637
        %v1662 = vsel %vm1614, %v1528, %v1638
        %v1663 = vsel %vm1615, %v1533, %v1639
        %v1664 = vsel %vm1616, %v1536, %v1640
        %v1665 = vsel %vm1617, %v1541, %v1641
        %v1666 = vsel %vm1618, %v1544, %v1642
        %v1667 = vsel %vm1619, %v1549, %v1643
        %v1668 = vsel %vm1620, %v1552, %v1644
        %v1669 = vsel %vm1621, %v1557, %v1645
        %v1670 = vsel %vm1622, %v1560, %v1646
        %v1671 = vsel %vm1623, %v1565, %v1647
        %v1672 = vsel %vm1624, %v1568, %v1648
        %v1673 = vsel %vm1625, %v1573, %v1649
        %v1674 = vsel %vm1626, %v1576, %v1650
        %v1675 = vsel %vm1627, %v1581, %v1651
        %v1676 = vsel %vm1628, %v1584, %v1652
        %v1677 = vsel %vm1629, %v1589, %v1653
        %v1678 = vsel %vm1630, %v1592, %v1654
        %v1679 = vsel %vm1631, %v1597, %v1655
        %v1680 = vsel %vm1632, %v1600, %v1656
        %v1681 = vsel %vm1633, %v1605, %v1657
        %v1682 = vsel %vm1634, %v1608, %v1658
        %v1683 = vld [vmem:[%s5] sm:$0x1]
        %v1685 = vlaneseq
        %v1686 = vshrl.u32 %v1685, 7
        %v1687 = vsub.s32 0, %v1686
        %v1688 = vrot.slane %v1683, %v1687
        %v1690 = vmul.f32 %v1659, %v1688
        %v1691 = vmul.f32 %v1660, %v1688
        %v1692 = vmul.f32 %v1661, %v1688
        %v1693 = vmul.f32 %v1662, %v1688
        %v1694 = vmul.f32 %v1663, %v1688
        %v1695 = vmul.f32 %v1664, %v1688
        %v1696 = vmul.f32 %v1665, %v1688
        %v1697 = vmul.f32 %v1666, %v1688
        %v1698 = vmul.f32 %v1667, %v1688
        %v1699 = vmul.f32 %v1668, %v1688
        %v1700 = vmul.f32 %v1669, %v1688
        %v1701 = vmul.f32 %v1670, %v1688
        %v1702 = vmul.f32 %v1671, %v1688
        %v1703 = vmul.f32 %v1672, %v1688
        %v1704 = vmul.f32 %v1673, %v1688
        %v1705 = vmul.f32 %v1674, %v1688
        %v1706 = vmul.f32 %v1675, %v1688
        %v1707 = vmul.f32 %v1676, %v1688
        %v1708 = vmul.f32 %v1677, %v1688
        %v1709 = vmul.f32 %v1678, %v1688
        %v1710 = vmul.f32 %v1679, %v1688
        %v1711 = vmul.f32 %v1680, %v1688
        %v1712 = vmul.f32 %v1681, %v1688
        %v1713 = vmul.f32 %v1682, %v1688
        %1714 = vadd.xlane.f32.xlu0 %v1690
        %v1715 = vpop.xlane.xlu0 %1714
        %1716 = vadd.xlane.f32.xlu0 %v1691
        %v1717 = vpop.xlane.xlu0 %1716
        %1718 = vadd.xlane.f32.xlu0 %v1692
        %v1719 = vpop.xlane.xlu0 %1718
        %1720 = vadd.xlane.f32.xlu0 %v1693
        %v1721 = vpop.xlane.xlu0 %1720
        %1722 = vadd.xlane.f32.xlu0 %v1694
        %v1723 = vpop.xlane.xlu0 %1722
        %1724 = vadd.xlane.f32.xlu0 %v1695
        %v1725 = vpop.xlane.xlu0 %1724
        %1726 = vadd.xlane.f32.xlu0 %v1696
        %v1727 = vpop.xlane.xlu0 %1726
        %1728 = vadd.xlane.f32.xlu0 %v1697
        %v1729 = vpop.xlane.xlu0 %1728
        %1730 = vadd.xlane.f32.xlu0 %v1698
        %v1731 = vpop.xlane.xlu0 %1730
        %1732 = vadd.xlane.f32.xlu0 %v1699
        %v1733 = vpop.xlane.xlu0 %1732
        %1734 = vadd.xlane.f32.xlu0 %v1700
        %v1735 = vpop.xlane.xlu0 %1734
        %1736 = vadd.xlane.f32.xlu0 %v1701
        %v1737 = vpop.xlane.xlu0 %1736
        %1738 = vadd.xlane.f32.xlu0 %v1702
        %v1739 = vpop.xlane.xlu0 %1738
        %1740 = vadd.xlane.f32.xlu0 %v1703
        %v1741 = vpop.xlane.xlu0 %1740
        %1742 = vadd.xlane.f32.xlu0 %v1704
        %v1743 = vpop.xlane.xlu0 %1742
        %1744 = vadd.xlane.f32.xlu0 %v1705
        %v1745 = vpop.xlane.xlu0 %1744
        %1746 = vadd.xlane.f32.xlu0 %v1706
        %v1747 = vpop.xlane.xlu0 %1746
        %1748 = vadd.xlane.f32.xlu0 %v1707
        %v1749 = vpop.xlane.xlu0 %1748
        %1750 = vadd.xlane.f32.xlu0 %v1708
        %v1751 = vpop.xlane.xlu0 %1750
        %1752 = vadd.xlane.f32.xlu0 %v1709
        %v1753 = vpop.xlane.xlu0 %1752
        %1754 = vadd.xlane.f32.xlu0 %v1710
        %v1755 = vpop.xlane.xlu0 %1754
        %1756 = vadd.xlane.f32.xlu0 %v1711
        %v1757 = vpop.xlane.xlu0 %1756
        %1758 = vadd.xlane.f32.xlu0 %v1712
        %v1759 = vpop.xlane.xlu0 %1758
        %1760 = vadd.xlane.f32.xlu0 %v1713
        %v1761 = vpop.xlane.xlu0 %1760
        %s1762 = sld [smem:[#allocation2]]
        %v1763 = vstv %s1762
        %v1764 = vadd.f32 %v1715, %v1763
        %v1765 = vadd.f32 %v1717, %v1763
        %v1766 = vadd.f32 %v1719, %v1763
        %v1767 = vadd.f32 %v1721, %v1763
        %v1768 = vadd.f32 %v1723, %v1763
        %v1769 = vadd.f32 %v1725, %v1763
        %v1770 = vadd.f32 %v1727, %v1763
        %v1771 = vadd.f32 %v1729, %v1763
        %v1772 = vadd.f32 %v1731, %v1763
        %v1773 = vadd.f32 %v1733, %v1763
        %v1774 = vadd.f32 %v1735, %v1763
        %v1775 = vadd.f32 %v1737, %v1763
        %v1776 = vadd.f32 %v1739, %v1763
        %v1777 = vadd.f32 %v1741, %v1763
        %v1778 = vadd.f32 %v1743, %v1763
        %v1779 = vadd.f32 %v1745, %v1763
        %v1780 = vadd.f32 %v1747, %v1763
        %v1781 = vadd.f32 %v1749, %v1763
        %v1782 = vadd.f32 %v1751, %v1763
        %v1783 = vadd.f32 %v1753, %v1763
        %v1784 = vadd.f32 %v1755, %v1763
        %v1785 = vadd.f32 %v1757, %v1763
        %v1786 = vadd.f32 %v1759, %v1763
        %v1787 = vadd.f32 %v1761, %v1763
        %v1788 = vxor.u32 %v1764, 2147483648
        %v1789 = vxor.u32 %v1765, 2147483648
        %v1790 = vxor.u32 %v1766, 2147483648
        %v1791 = vxor.u32 %v1767, 2147483648
        %v1792 = vxor.u32 %v1768, 2147483648
        %v1793 = vxor.u32 %v1769, 2147483648
        %v1794 = vxor.u32 %v1770, 2147483648
        %v1795 = vxor.u32 %v1771, 2147483648
        %v1796 = vxor.u32 %v1772, 2147483648
        %v1797 = vxor.u32 %v1773, 2147483648
        %v1798 = vxor.u32 %v1774, 2147483648
        %v1799 = vxor.u32 %v1775, 2147483648
        %v1800 = vxor.u32 %v1776, 2147483648
        %v1801 = vxor.u32 %v1777, 2147483648
        %v1802 = vxor.u32 %v1778, 2147483648
        %v1803 = vxor.u32 %v1779, 2147483648
        %v1804 = vxor.u32 %v1780, 2147483648
        %v1805 = vxor.u32 %v1781, 2147483648
        %v1806 = vxor.u32 %v1782, 2147483648
        %v1807 = vxor.u32 %v1783, 2147483648
        %v1808 = vxor.u32 %v1784, 2147483648
        %v1809 = vxor.u32 %v1785, 2147483648
        %v1810 = vxor.u32 %v1786, 2147483648
        %v1811 = vxor.u32 %v1787, 2147483648
        %v1812 = vmul.f32 %v1788, 1.442695
        %v1813 = vpow.pop %v1812
        %v1814 = vmul.f32 %v1789, 1.442695
        %v1815 = vpow.pop %v1814
        %v1816 = vmul.f32 %v1790, 1.442695
        %v1817 = vpow.pop %v1816
        %v1818 = vmul.f32 %v1791, 1.442695
        %v1819 = vpow.pop %v1818
        %v1820 = vmul.f32 %v1792, 1.442695
        %v1821 = vpow.pop %v1820
        %v1822 = vmul.f32 %v1793, 1.442695
        %v1823 = vpow.pop %v1822
        %v1824 = vmul.f32 %v1794, 1.442695
        %v1825 = vpow.pop %v1824
        %v1826 = vmul.f32 %v1795, 1.442695
        %v1827 = vpow.pop %v1826
        %v1828 = vmul.f32 %v1796, 1.442695
        %v1829 = vpow.pop %v1828
        %v1830 = vmul.f32 %v1797, 1.442695
        %v1831 = vpow.pop %v1830
        %v1832 = vmul.f32 %v1798, 1.442695
        %v1833 = vpow.pop %v1832
        %v1834 = vmul.f32 %v1799, 1.442695
        %v1835 = vpow.pop %v1834
        %v1836 = vmul.f32 %v1800, 1.442695
        %v1837 = vpow.pop %v1836
        %v1838 = vmul.f32 %v1801, 1.442695
        %v1839 = vpow.pop %v1838
        %v1840 = vmul.f32 %v1802, 1.442695
        %v1841 = vpow.pop %v1840
        %v1842 = vmul.f32 %v1803, 1.442695
        %v1843 = vpow.pop %v1842
        %v1844 = vmul.f32 %v1804, 1.442695
        %v1845 = vpow.pop %v1844
        %v1846 = vmul.f32 %v1805, 1.442695
        %v1847 = vpow.pop %v1846
        %v1848 = vmul.f32 %v1806, 1.442695
        %v1849 = vpow.pop %v1848
        %v1850 = vmul.f32 %v1807, 1.442695
        %v1851 = vpow.pop %v1850
        %v1852 = vmul.f32 %v1808, 1.442695
        %v1853 = vpow.pop %v1852
        %v1854 = vmul.f32 %v1809, 1.442695
        %v1855 = vpow.pop %v1854
        %v1856 = vmul.f32 %v1810, 1.442695
        %v1857 = vpow.pop %v1856
        %v1858 = vmul.f32 %v1811, 1.442695
        %v1859 = vpow.pop %v1858
        %v1860 = vadd.f32 %v1813, 1.0
        %v1861 = vadd.f32 %v1815, 1.0
        %v1862 = vadd.f32 %v1817, 1.0
        %v1863 = vadd.f32 %v1819, 1.0
        %v1864 = vadd.f32 %v1821, 1.0
        %v1865 = vadd.f32 %v1823, 1.0
        %v1866 = vadd.f32 %v1825, 1.0
        %v1867 = vadd.f32 %v1827, 1.0
        %v1868 = vadd.f32 %v1829, 1.0
        %v1869 = vadd.f32 %v1831, 1.0
        %v1870 = vadd.f32 %v1833, 1.0
        %v1871 = vadd.f32 %v1835, 1.0
        %v1872 = vadd.f32 %v1837, 1.0
        %v1873 = vadd.f32 %v1839, 1.0
        %v1874 = vadd.f32 %v1841, 1.0
        %v1875 = vadd.f32 %v1843, 1.0
        %v1876 = vadd.f32 %v1845, 1.0
        %v1877 = vadd.f32 %v1847, 1.0
        %v1878 = vadd.f32 %v1849, 1.0
        %v1879 = vadd.f32 %v1851, 1.0
        %v1880 = vadd.f32 %v1853, 1.0
        %v1881 = vadd.f32 %v1855, 1.0
        %v1882 = vadd.f32 %v1857, 1.0
        %v1883 = vadd.f32 %v1859, 1.0
        %v1884 = vrcp.pop %v1860
        %v1885 = vmul.f32 1.0, %v1884
        %v1886 = vrcp.pop %v1861
        %v1887 = vmul.f32 1.0, %v1886
        %v1888 = vrcp.pop %v1862
        %v1889 = vmul.f32 1.0, %v1888
        %v1890 = vrcp.pop %v1863
        %v1891 = vmul.f32 1.0, %v1890
        %v1892 = vrcp.pop %v1864
        %v1893 = vmul.f32 1.0, %v1892
        %v1894 = vrcp.pop %v1865
        %v1895 = vmul.f32 1.0, %v1894
        %v1896 = vrcp.pop %v1866
        %v1897 = vmul.f32 1.0, %v1896
        %v1898 = vrcp.pop %v1867
        %v1899 = vmul.f32 1.0, %v1898
        %v1900 = vrcp.pop %v1868
        %v1901 = vmul.f32 1.0, %v1900
        %v1902 = vrcp.pop %v1869
        %v1903 = vmul.f32 1.0, %v1902
        %v1904 = vrcp.pop %v1870
        %v1905 = vmul.f32 1.0, %v1904
        %v1906 = vrcp.pop %v1871
        %v1907 = vmul.f32 1.0, %v1906
        %v1908 = vrcp.pop %v1872
        %v1909 = vmul.f32 1.0, %v1908
        %v1910 = vrcp.pop %v1873
        %v1911 = vmul.f32 1.0, %v1910
        %v1912 = vrcp.pop %v1874
        %v1913 = vmul.f32 1.0, %v1912
        %v1914 = vrcp.pop %v1875
        %v1915 = vmul.f32 1.0, %v1914
        %v1916 = vrcp.pop %v1876
        %v1917 = vmul.f32 1.0, %v1916
        %v1918 = vrcp.pop %v1877
        %v1919 = vmul.f32 1.0, %v1918
        %v1920 = vrcp.pop %v1878
        %v1921 = vmul.f32 1.0, %v1920
        %v1922 = vrcp.pop %v1879
        %v1923 = vmul.f32 1.0, %v1922
        %v1924 = vrcp.pop %v1880
        %v1925 = vmul.f32 1.0, %v1924
        %v1926 = vrcp.pop %v1881
        %v1927 = vmul.f32 1.0, %v1926
        %v1928 = vrcp.pop %v1882
        %v1929 = vmul.f32 1.0, %v1928
        %v1930 = vrcp.pop %v1883
        %v1931 = vmul.f32 1.0, %v1930
        %vm1932 = vcmask 7168
        %1933 = vst.msk [vmem:[%s330] sm:$0xff] %vm1932, %v1885
        %1934 = vst.msk [vmem:[%s330 + $0x8] sm:$0xff] %vm1932, %v1887
        %1935 = vst.msk [vmem:[%s330 + $0x10] sm:$0xff] %vm1932, %v1889
        %1936 = vst.msk [vmem:[%s330 + $0x18] sm:$0xff] %vm1932, %v1891
        %1937 = vst.msk [vmem:[%s330 + $0x20] sm:$0xff] %vm1932, %v1893
        %1938 = vst.msk [vmem:[%s330 + $0x28] sm:$0xff] %vm1932, %v1895
        %1939 = vst.msk [vmem:[%s330 + $0x30] sm:$0xff] %vm1932, %v1897
        %1940 = vst.msk [vmem:[%s330 + $0x38] sm:$0xff] %vm1932, %v1899
        %1941 = vst.msk [vmem:[%s330 + $0x40] sm:$0xff] %vm1932, %v1901
        %1942 = vst.msk [vmem:[%s330 + $0x48] sm:$0xff] %vm1932, %v1903
        %1943 = vst.msk [vmem:[%s330 + $0x50] sm:$0xff] %vm1932, %v1905
        %1944 = vst.msk [vmem:[%s330 + $0x58] sm:$0xff] %vm1932, %v1907
        %1945 = vst.msk [vmem:[%s330 + $0x60] sm:$0xff] %vm1932, %v1909
        %1946 = vst.msk [vmem:[%s330 + $0x68] sm:$0xff] %vm1932, %v1911
        %1947 = vst.msk [vmem:[%s330 + $0x70] sm:$0xff] %vm1932, %v1913
        %1948 = vst.msk [vmem:[%s330 + $0x78] sm:$0xff] %vm1932, %v1915
        %1949 = vst.msk [vmem:[%s330 + $0x80] sm:$0xff] %vm1932, %v1917
        %1950 = vst.msk [vmem:[%s330 + $0x88] sm:$0xff] %vm1932, %v1919
        %1951 = vst.msk [vmem:[%s330 + $0x90] sm:$0xff] %vm1932, %v1921
        %1952 = vst.msk [vmem:[%s330 + $0x98] sm:$0xff] %vm1932, %v1923
        %1953 = vst.msk [vmem:[%s330 + $0xa0] sm:$0xff] %vm1932, %v1925
        %1954 = vst.msk [vmem:[%s330 + $0xa8] sm:$0xff] %vm1932, %v1927
        %1955 = vst.msk [vmem:[%s330 + $0xb0] sm:$0xff] %vm1932, %v1929
        %1956 = vst.msk [vmem:[%s330 + $0xb8] sm:$0xff] %vm1932, %v1931
        %s1957 = smul.u32 24, %s23
        %p1958 = scmp.lt.s32.totalorder %s1957, 47
        %s1959 = scalar_select %p1958, %s1957, 47
        %s1960 = smul.addr %s1959, 8
        %s1961 = scalar_lea.vmem %s7, %s1960
        // Predicated region
        $region61: #{_discriminator_forward_impl.1} parent=47 // pred_check
          %p1962 = pneg %p193
        $region62: #{_discriminator_forward_impl.1} parent=47 // pred_check_branch
          %1964 = sbr.rel (%p1962) target = $region64
        $region63: #{_discriminator_forward_impl.1} parent=47 // pred_region
          %s1965 = smul.u32 24, %s23
        $region64: #{_discriminator_forward_impl.1} parent=47 // pred_fallthru
          _
      $region48: #{_discriminator_forward_impl.1} parent=5 // pred_fallthru
        _
      %p1966 = scmp.le.s32.totalorder 2, %s18
      // Predicated region
      $region65: #{_discriminator_forward_impl.1} parent=5 // pred_check
        %p1967 = pneg %p1966
      $region66: #{_discriminator_forward_impl.1} parent=5 // pred_check_branch
        %1969 = sbr.rel (%p1967) target = $region68
      $region67: #{_discriminator_forward_impl.1} parent=5 // pred_region
        %s1970 = ssub.s32 %s18, 2
        // Predicated region
        $region69: #{_discriminator_forward_impl.1} parent=67 // pred_check
          %p1971 = pneg %p199
        $region70: #{_discriminator_forward_impl.1} parent=67 // pred_check_branch
          %1973 = sbr.rel (%p1971) target = $region72
        $region71: #{_discriminator_forward_impl.1} parent=67 // pred_region
          %s1974 = smul.u32 24, %s24
          %p1975 = scmp.lt.s32.totalorder %s1974, 47
          %s1976 = scalar_select %p1975, %s1974, 47
          %s1977 = smul.addr %s1976, 8
          %s1978 = scalar_lea.vmem %s7, %s1977
        $region72: #{_discriminator_forward_impl.1} parent=67 // pred_fallthru
          _
      $region68: #{_discriminator_forward_impl.1} parent=5 // pred_fallthru
        _
    $region6: #{_discriminator_forward_impl.1} parent=1 // loop_footer
      %s22 = sadd.s32 1, %s18
    $region7: #{_discriminator_forward_impl.1} parent=1 // loop_footer_branch
      %17 = sbr.rel target = $region3
    $region8: #{_discriminator_forward_impl.1} parent=1 // loop_exit
      _
    %1979 = vsyncpa [#allocation4], 1
    %s1980 = scalar_lea.sflag [#allocation4], 1
    %1981 = vsyncpa %s1980, 1
    %1982 = vsyncpa [#allocation6], 1

</llo_original>
